<compile_context>
chip_gen: v6e
topology: v6e:2x2x1
jax: 0.10.0
libtpu: 0.0.40
codegen_flags: <defaults>
</compile_context>

<pallas_src>
import functools

import jax
import jax.numpy as jnp
from jax import lax
from jax.experimental import pallas as pl
from jax.experimental.pallas import tpu as pltpu

LANE = 128   # lane (last-dim) padding target
SUB = 8      # sublane padding target
VMEM_LIMIT = 48 * 1024 * 1024   # fits v5e/v6e (128 MiB) and v7x (64 MiB) scoped VMEM


def _ru(x, m):
    return ((x + m - 1) // m) * m


def _pad2d(a, rows, cols, dtype=None):
    out = jnp.pad(a, ((0, rows - a.shape[0]), (0, cols - a.shape[1])))
    return out.astype(dtype) if dtype is not None else out


# ----------------------------------------------------------------------------
# Fused message-passing layer kernel (grid = edge tiles, node state resident)
# ----------------------------------------------------------------------------
def fused_mp_layer_kernel(src_ref, dst_ref, x_ref, nattr_ref, eattr_ref,
                          elen_ref, fcw1_ref, fcw2_ref, fcw3_ref, wmsg_ref,
                          wedge_ref, wsc_ref, wattr_ref, out_ref,
                          *, apply_act):
    e = pl.program_id(0)              # edge-tile index  ("arbitrary" reduction)
    te = dst_ref.shape[1]
    npad = x_ref.shape[0]
    bf16, f32 = jnp.bfloat16, jnp.float32

    # out_ref block index is constant across the grid -> VMEM-resident accumulator.
    @pl.when(e == 0)
    def _init():
        out_ref[...] = jnp.zeros_like(out_ref)

    # ---- radial MLP on edge-length embedding: w_e = FC(elen)  [TE, F_pad] ----
    h = jax.nn.silu(jnp.dot(elen_ref[...], fcw1_ref[...],
                            preferred_element_type=f32))
    h = jax.nn.silu(jnp.dot(h.astype(bf16), fcw2_ref[...],
                            preferred_element_type=f32))
    w_e = jnp.dot(h.astype(bf16), fcw3_ref[...], preferred_element_type=f32)

    # ---- in-kernel gather x[src] via one-hot matmul on VMEM-resident x ----
    gather_oh = (lax.broadcasted_iota(jnp.int32, (te, npad), 1)
                 == src_ref[...]).astype(bf16)                    # [TE, Npad]
    x_src = jnp.dot(gather_oh, x_ref[...],
                    preferred_element_type=f32)                   # [TE, Fin_pad]

    # ---- edge messages (1/sqrt(num_neighbors) pre-folded into weights) ----
    msg = (jnp.dot(x_src.astype(bf16), wmsg_ref[...],
                   preferred_element_type=f32) * w_e
           + jnp.dot(eattr_ref[...], wedge_ref[...],
                     preferred_element_type=f32))                 # [TE, F_pad]

    # ---- scatter-add over all nodes (f32 accumulation into resident out) ----
    scat_oh = (lax.broadcasted_iota(jnp.int32, (npad, te), 0)
               == dst_ref[...]).astype(f32)                       # [Npad, TE]
    out_ref[...] += jnp.dot(scat_oh, msg, preferred_element_type=f32)

    # ---- node update (self-connection + node-attr mix + agg, optional gate) ----
    @pl.when(e == pl.num_programs(0) - 1)
    def _finalize():
        y = (jnp.dot(x_ref[...], wsc_ref[...], preferred_element_type=f32)
             + jnp.dot(nattr_ref[...], wattr_ref[...],
                       preferred_element_type=f32)
             + out_ref[...])
        out_ref[...] = jax.nn.silu(y) if apply_act else y


def fused_mp_layer(src_col, dst_row, x_pad, nattr_pad, eattr_pad, elen_pad, p,
                   *, apply_act, te):
    npad, fin_pad = x_pad.shape
    f_pad = p["w_msg"].shape[1]
    epad = src_col.shape[0]
    a_pad = nattr_pad.shape[1]
    ea_pad = eattr_pad.shape[1]
    b_pad = elen_pad.shape[1]
    grid = (epad // te,)

    kern = functools.partial(fused_mp_layer_kernel, apply_act=apply_act)
    return pl.pallas_call(
        kern,
        out_shape=jax.ShapeDtypeStruct((npad, f_pad), jnp.float32),
        grid=grid,
        in_specs=[
            pl.BlockSpec((te, 1), lambda e: (e, 0)),               # edge_src (col)
            pl.BlockSpec((1, te), lambda e: (0, e)),               # edge_dst (row)
            pl.BlockSpec((npad, fin_pad), lambda e: (0, 0)),       # x, VMEM resident
            pl.BlockSpec((npad, a_pad), lambda e: (0, 0)),         # node_attr, resident
            pl.BlockSpec((te, ea_pad), lambda e: (e, 0)),          # edge_attr tile
            pl.BlockSpec((te, b_pad), lambda e: (e, 0)),           # edge length emb
            pl.BlockSpec(p["fc_w1"].shape, lambda e: (0, 0)),      # weights: resident
            pl.BlockSpec(p["fc_w2"].shape, lambda e: (0, 0)),
            pl.BlockSpec(p["fc_w3"].shape, lambda e: (0, 0)),
            pl.BlockSpec(p["w_msg"].shape, lambda e: (0, 0)),
            pl.BlockSpec(p["w_edge"].shape, lambda e: (0, 0)),
            pl.BlockSpec(p["w_sc"].shape, lambda e: (0, 0)),
            pl.BlockSpec(p["w_attr"].shape, lambda e: (0, 0)),
        ],
        out_specs=pl.BlockSpec((npad, f_pad), lambda e: (0, 0)),   # resident accumulator
        compiler_params=pltpu.CompilerParams(
            dimension_semantics=("arbitrary",),
            vmem_limit_bytes=VMEM_LIMIT),
    )(src_col, dst_row, x_pad, nattr_pad, eattr_pad, elen_pad,
      p["fc_w1"], p["fc_w2"], p["fc_w3"], p["w_msg"], p["w_edge"],
      p["w_sc"], p["w_attr"])


# ----------------------------------------------------------------------------
# Graph pooling kernel: scatter(atoms_fec, batch) -> per-graph sums
# ----------------------------------------------------------------------------
def graph_pool_kernel(batch_ref, feats_ref, out_ref):
    g = out_ref.shape[0]
    n = feats_ref.shape[0]
    onehot = (lax.broadcasted_iota(jnp.int32, (g, n), 0)
              == batch_ref[...]).astype(jnp.float32)
    out_ref[...] = jnp.dot(onehot, feats_ref[...],
                           preferred_element_type=jnp.float32)


def graph_pool(batch_row, feats, gpad):
    npad, f_pad = feats.shape
    return pl.pallas_call(
        graph_pool_kernel,
        out_shape=jax.ShapeDtypeStruct((gpad, f_pad), jnp.float32),
        in_specs=[pl.BlockSpec((1, npad), lambda: (0, 0)),
                  pl.BlockSpec((npad, f_pad), lambda: (0, 0))],
        out_specs=pl.BlockSpec((gpad, f_pad), lambda: (0, 0)),
        compiler_params=pltpu.CompilerParams(vmem_limit_bytes=VMEM_LIMIT),
    )(batch_row, feats)


# ----------------------------------------------------------------------------
# Parameter init (matches original module structure) and padded prep
# ----------------------------------------------------------------------------
def make_layer_params(key, f_in, f_out, n_attr, e_attr, n_basis, mul):
    ks = jax.random.split(key, 7)

    def w(k, shape):
        return (jax.random.normal(k, shape, jnp.float32)
                / jnp.sqrt(jnp.float32(shape[0])))

    return dict(
        fc_w1=w(ks[0], (n_basis, mul)),
        fc_w2=w(ks[1], (mul, 2 * mul)),
        fc_w3=w(ks[2], (2 * mul, f_out)),
        w_msg=w(ks[3], (f_in, f_out)),
        w_edge=w(ks[4], (e_attr, f_out)),
        w_sc=w(ks[5], (f_in, f_out)),
        w_attr=w(ks[6], (n_attr, f_out)),
    )


def init_energy_predictor_params(key, f_in, hidden, f_out, n_attr, e_attr,
                                 n_basis, mul, mpn_layers):
    # mp_edges: [f_in] + mpn_layers*[hidden] + [hidden]  -> mpn_layers+1 layers
    # mp_final: [hidden, hidden, f_out]                  -> 2 layers
    dims_edges = [f_in] + mpn_layers * [hidden] + [hidden]
    dims_final = [hidden, hidden, f_out]
    keys = jax.random.split(key, (len(dims_edges) - 1) + (len(dims_final) - 1))
    ki, mp_edges, mp_final = 0, [], []
    for a, b in zip(dims_edges[:-1], dims_edges[1:]):
        mp_edges.append(make_layer_params(keys[ki], a, b, n_attr, e_attr,
                                          n_basis, mul)); ki += 1
    for a, b in zip(dims_final[:-1], dims_final[1:]):
        mp_final.append(make_layer_params(keys[ki], a, b, n_attr, e_attr,
                                          n_basis, mul)); ki += 1
    return dict(mp_edges=mp_edges, mp_final=mp_final)


def _prepare_layer(p, inv_sqrt_nn):
    """Zero-pad all dims to 128, cast to bf16, fold 1/sqrt(num_neighbors)."""
    def pad_w(w, scale=1.0):
        return _pad2d(w * scale, _ru(w.shape[0], LANE), _ru(w.shape[1], LANE),
                      jnp.bfloat16)
    return dict(
        fc_w1=pad_w(p["fc_w1"]), fc_w2=pad_w(p["fc_w2"]), fc_w3=pad_w(p["fc_w3"]),
        w_msg=pad_w(p["w_msg"], inv_sqrt_nn),
        w_edge=pad_w(p["w_edge"], inv_sqrt_nn),
        w_sc=pad_w(p["w_sc"]), w_attr=pad_w(p["w_attr"]),
    )


# ----------------------------------------------------------------------------
# Forward pass (Pallas kernels + thin JAX glue for padding/slicing)
# ----------------------------------------------------------------------------
def energy_predictor_forward(params, embed_on_edges, node_attr, edge_src,
                             edge_dst, edge_attr, edge_length_embedding,
                             batch, num_neighbors, num_graphs, *, te=128):
    N, f_in = embed_on_edges.shape
    E = edge_src.shape[0]
    inv_sqrt_nn = 1.0 / float(num_neighbors) ** 0.5

    npad = _ru(max(N, SUB), SUB)
    epad = _ru(max(E, te), te)
    gpad = _ru(max(num_graphs, SUB), SUB)

    # lane-dense (128) feature padding, bf16 activations/attrs for the MXU
    x_pad = _pad2d(embed_on_edges, npad, _ru(f_in, LANE), jnp.bfloat16)
    nattr_pad = _pad2d(node_attr, npad, _ru(node_attr.shape[1], LANE),
                       jnp.bfloat16)
    eattr_pad = _pad2d(edge_attr, epad, _ru(edge_attr.shape[1], LANE),
                       jnp.bfloat16)
    elen_pad = _pad2d(edge_length_embedding, epad,
                      _ru(edge_length_embedding.shape[1], LANE), jnp.bfloat16)

    # padded edges/nodes get out-of-range ids -> never gather/scatter/pool
    src_col = jnp.full((epad, 1), npad, jnp.int32).at[:E, 0].set(
        edge_src.astype(jnp.int32))
    dst_row = jnp.full((1, epad), npad, jnp.int32).at[0, :E].set(
        edge_dst.astype(jnp.int32))
    batch_row = jnp.full((1, npad), gpad, jnp.int32).at[0, :N].set(
        batch.astype(jnp.int32))

    mp_edges = [_prepare_layer(p, inv_sqrt_nn) for p in params["mp_edges"]]
    mp_final = [_prepare_layer(p, inv_sqrt_nn) for p in params["mp_final"]]
    layers = ([(p, True) for p in mp_edges]
              + [(p, i < len(mp_final) - 1) for i, p in enumerate(mp_final)])

    h = x_pad
    y = None
    for p, act in layers:
        y = fused_mp_layer(src_col, dst_row, h, nattr_pad, eattr_pad, elen_pad,
                           p, apply_act=act, te=te)            # f32 [Npad, F_pad]
        h = y.astype(jnp.bfloat16)                             # next-layer input
    atoms_fec_pad = y                                          # f32 [Npad, F_pad]

    pooled_pad = graph_pool(batch_row, atoms_fec_pad, gpad)

    f_out = params["mp_final"][-1]["w_sc"].shape[1]
    return pooled_pad[:num_graphs, :f_out], atoms_fec_pad[:N, :f_out]


# ----------------------------------------------------------------------------
# Pure-JAX reference mirroring the kernel arithmetic (for validation)
# ----------------------------------------------------------------------------
def reference_forward(params, embed_on_edges, node_attr, edge_src, edge_dst,
                      edge_attr, edge_length_embedding, batch, num_neighbors,
                      num_graphs):
    N, f_in = embed_on_edges.shape
    inv_sqrt_nn = 1.0 / float(num_neighbors) ** 0.5
    b16 = lambda a: a.astype(jnp.bfloat16)
    f32 = jnp.float32

    x = _pad2d(embed_on_edges, N, _ru(f_in, LANE))
    nattr = _pad2d(node_attr, N, _ru(node_attr.shape[1], LANE))
    eattr = _pad2d(edge_attr, edge_attr.shape[0], _ru(edge_attr.shape[1], LANE))
    elen = _pad2d(edge_length_embedding, edge_length_embedding.shape[0],
                  _ru(edge_length_embedding.shape[1], LANE))
    layers = ([(_prepare_layer(p, inv_sqrt_nn), True) for p in params["mp_edges"]]
              + [(_prepare_layer(p, inv_sqrt_nn), i < len(params["mp_final"]) - 1)
                 for i, p in enumerate(params["mp_final"])])

    for p, act in layers:
        h = jax.nn.silu(jnp.dot(b16(elen), p["fc_w1"], preferred_element_type=f32))
        h = jax.nn.silu(jnp.dot(b16(h), p["fc_w2"], preferred_element_type=f32))
        w_e = jnp.dot(b16(h), p["fc_w3"], preferred_element_type=f32)
        x_src = b16(x).astype(f32)[edge_src]
        msg = (jnp.dot(b16(x_src), p["w_msg"], preferred_element_type=f32) * w_e
               + jnp.dot(b16(eattr), p["w_edge"], preferred_element_type=f32))
        agg = jax.ops.segment_sum(msg, edge_dst, num_segments=N)
        y = (jnp.dot(b16(x), p["w_sc"], preferred_element_type=f32)
             + jnp.dot(b16(nattr), p["w_attr"], preferred_element_type=f32)
             + agg)
        x = jax.nn.silu(y) if act else y

    f_out = params["mp_final"][-1]["w_sc"].shape[1]
    atoms = x[:, :f_out]
    pooled = jax.ops.segment_sum(atoms, batch, num_segments=num_graphs)
    return pooled, atoms


# ----------------------------------------------------------------------------
if __name__ == "__main__":
    key = jax.random.PRNGKey(0)

    # small synthetic graph batch
    G, nodes_per_graph = 2, 8
    N = G * nodes_per_graph                  # 16 nodes
    E = 200                                  # padded to 256 -> 2 edge tiles of 128
    F_in, hidden, F_out = 16, 16, 1          # per-atom scalar energy contribution
    A, EA, n_basis, mul = 4, 9, 8, 16        # node-attr, edge-attr (sph harm lmax=2), radial basis, mul
    mpn_layers = 2
    num_neighbors = float(E) / N

    ks = jax.random.split(key, 7)
    embed_on_edges = jax.random.normal(ks[0], (N, F_in), jnp.float32)
    node_attr = jax.random.normal(ks[1], (N, A), jnp.float32)
    edge_src = jax.random.randint(ks[2], (E,), 0, N, dtype=jnp.int32)
    edge_dst = jax.random.randint(ks[3], (E,), 0, N, dtype=jnp.int32)
    edge_attr = jax.random.normal(ks[4], (E, EA), jnp.float32)
    edge_length_embedding = jax.random.normal(ks[5], (E, n_basis), jnp.float32)
    batch = jnp.repeat(jnp.arange(G, dtype=jnp.int32), nodes_per_graph)

    params = init_energy_predictor_params(ks[6], F_in, hidden, F_out,
                                          A, EA, n_basis, mul, mpn_layers)

    pooled, atoms_fec = energy_predictor_forward(
        params, embed_on_edges, node_attr, edge_src, edge_dst, edge_attr,
        edge_length_embedding, batch, num_neighbors, G)
    jax.block_until_ready((pooled, atoms_fec))

    assert pooled.shape == (G, F_out)
    assert atoms_fec.shape == (N, F_out)

    pooled_ref, atoms_ref = reference_forward(
        params, embed_on_edges, node_attr, edge_src, edge_dst, edge_attr,
        edge_length_embedding, batch, num_neighbors, G)
    assert bool(jnp.allclose(atoms_fec, atoms_ref, rtol=5e-2, atol=5e-2)), \
        "atoms_fec mismatch vs pure-JAX reference"
    assert bool(jnp.allclose(pooled, pooled_ref, rtol=5e-2, atol=5e-2)), \
        "pooled mismatch vs pure-JAX reference"

    print("KERNEL_OK")
</pallas_src>

<mosaic_0001>
module attributes {stable_mosaic.version = 11 : i64} {
  func.func @fused_mp_layer_kernel(%arg0: i32, %arg1: memref<128x1xi32, #tpu.memory_space<vmem>>, %arg2: memref<1x128xi32, #tpu.memory_space<vmem>>, %arg3: memref<16x128xbf16, #tpu.memory_space<vmem>>, %arg4: memref<16x128xbf16, #tpu.memory_space<vmem>>, %arg5: memref<128x128xbf16, #tpu.memory_space<vmem>>, %arg6: memref<128x128xbf16, #tpu.memory_space<vmem>>, %arg7: memref<128x128xbf16, #tpu.memory_space<vmem>>, %arg8: memref<128x128xbf16, #tpu.memory_space<vmem>>, %arg9: memref<128x128xbf16, #tpu.memory_space<vmem>>, %arg10: memref<128x128xbf16, #tpu.memory_space<vmem>>, %arg11: memref<128x128xbf16, #tpu.memory_space<vmem>>, %arg12: memref<128x128xbf16, #tpu.memory_space<vmem>>, %arg13: memref<128x128xbf16, #tpu.memory_space<vmem>>, %arg14: memref<16x128xf32, #tpu.memory_space<vmem>>) attributes {dimension_semantics = [#tpu.dimension_semantics<arbitrary>], iteration_bounds = array<i64: 2>, scalar_prefetch = 0 : i64, scratch_operands = 0 : i64, tpu.core_type = #tpu.core_type<tc>, window_params = [{transform_indices = @transform_0, window_bounds = array<i64: 128, 1>}, {transform_indices = @transform_1, window_bounds = array<i64: 1, 128>}, {pipeline_mode = #tpu.pipeline_mode<synchronous>, transform_indices = @transform_2, window_bounds = array<i64: 16, 128>}, {pipeline_mode = #tpu.pipeline_mode<synchronous>, transform_indices = @transform_3, window_bounds = array<i64: 16, 128>}, {transform_indices = @transform_4, window_bounds = array<i64: 128, 128>}, {transform_indices = @transform_5, window_bounds = array<i64: 128, 128>}, {pipeline_mode = #tpu.pipeline_mode<synchronous>, transform_indices = @transform_6, window_bounds = array<i64: 128, 128>}, {pipeline_mode = #tpu.pipeline_mode<synchronous>, transform_indices = @transform_7, window_bounds = array<i64: 128, 128>}, {pipeline_mode = #tpu.pipeline_mode<synchronous>, transform_indices = @transform_8, window_bounds = array<i64: 128, 128>}, {pipeline_mode = #tpu.pipeline_mode<synchronous>, transform_indices = @transform_9, window_bounds = array<i64: 128, 128>}, {pipeline_mode = #tpu.pipeline_mode<synchronous>, transform_indices = @transform_10, window_bounds = array<i64: 128, 128>}, {pipeline_mode = #tpu.pipeline_mode<synchronous>, transform_indices = @transform_11, window_bounds = array<i64: 128, 128>}, {pipeline_mode = #tpu.pipeline_mode<synchronous>, transform_indices = @transform_12, window_bounds = array<i64: 128, 128>}, {pipeline_mode = #tpu.pipeline_mode<synchronous>, transform_indices = @transform_13, window_bounds = array<i64: 16, 128>}]} {
    %c0_i32 = arith.constant 0 : i32
    %0 = arith.cmpi eq, %arg0, %c0_i32 : i32
    %1 = arith.extui %0 : i1 to i32
    %c0_i32_0 = arith.constant 0 : i32
    %2 = arith.cmpi ne, %1, %c0_i32_0 : i32
    scf.if %2 {
      %cst_33 = arith.constant 0.000000e+00 : f32
      %54 = vector.broadcast %cst_33 : f32 to vector<16x128xf32>
      %c0_34 = arith.constant 0 : index
      %c0_35 = arith.constant 0 : index
      %55 = vector.load %arg14[%c0_34, %c0_35] : memref<16x128xf32, #tpu.memory_space<vmem>>, vector<16x128xf32>
      tpu.vector_store %arg14[%c0_34, %c0_35], %54 {strides = array<i32>} : memref<16x128xf32, #tpu.memory_space<vmem>>, vector<16x128xf32>,
    } else {
    }
    %c0 = arith.constant 0 : index
    %c0_1 = arith.constant 0 : index
    %3 = vector.load %arg6[%c0, %c0_1] : memref<128x128xbf16, #tpu.memory_space<vmem>>, vector<128x128xbf16>
    %c0_2 = arith.constant 0 : index
    %c0_3 = arith.constant 0 : index
    %4 = vector.load %arg7[%c0_2, %c0_3] : memref<128x128xbf16, #tpu.memory_space<vmem>>, vector<128x128xbf16>
    %cst = arith.constant dense<0.000000e+00> : vector<128x128xf32>
    %5 = tpu.matmul %3, %4, %cst {dimension_numbers = #tpu.dot_dimension_numbers<[1], [0], [0], [1], [0, 0, 1, 1], [], []>} : vector<128x128xbf16>, vector<128x128xbf16>, vector<128x128xf32> -> vector<128x128xf32>
    %6 = arith.negf %5 : vector<128x128xf32>
    %7 = math.exp %6 : vector<128x128xf32>
    %cst_4 = arith.constant 1.000000e+00 : f32
    %8 = vector.broadcast %cst_4 : f32 to vector<128x128xf32>
    %9 = arith.addf %8, %7 : vector<128x128xf32>
    %10 = arith.divf %8, %9 : vector<128x128xf32>
    %11 = arith.mulf %5, %10 : vector<128x128xf32>
    %12 = arith.truncf %11 : vector<128x128xf32> to vector<128x128xbf16>
    %c0_5 = arith.constant 0 : index
    %c0_6 = arith.constant 0 : index
    %13 = vector.load %arg8[%c0_5, %c0_6] : memref<128x128xbf16, #tpu.memory_space<vmem>>, vector<128x128xbf16>
    %cst_7 = arith.constant dense<0.000000e+00> : vector<128x128xf32>
    %14 = tpu.matmul %12, %13, %cst_7 {dimension_numbers = #tpu.dot_dimension_numbers<[1], [0], [0], [1], [0, 0, 1, 1], [], []>} : vector<128x128xbf16>, vector<128x128xbf16>, vector<128x128xf32> -> vector<128x128xf32>
    %15 = arith.negf %14 : vector<128x128xf32>
    %16 = math.exp %15 : vector<128x128xf32>
    %cst_8 = arith.constant 1.000000e+00 : f32
    %17 = vector.broadcast %cst_8 : f32 to vector<128x128xf32>
    %18 = arith.addf %17, %16 : vector<128x128xf32>
    %19 = arith.divf %17, %18 : vector<128x128xf32>
    %20 = arith.mulf %14, %19 : vector<128x128xf32>
    %21 = arith.truncf %20 : vector<128x128xf32> to vector<128x128xbf16>
    %c0_9 = arith.constant 0 : index
    %c0_10 = arith.constant 0 : index
    %22 = vector.load %arg9[%c0_9, %c0_10] : memref<128x128xbf16, #tpu.memory_space<vmem>>, vector<128x128xbf16>
    %cst_11 = arith.constant dense<0.000000e+00> : vector<128x128xf32>
    %23 = tpu.matmul %21, %22, %cst_11 {dimension_numbers = #tpu.dot_dimension_numbers<[1], [0], [0], [1], [0, 0, 1, 1], [], []>} : vector<128x128xbf16>, vector<128x128xbf16>, vector<128x128xf32> -> vector<128x128xf32>
    %24 = tpu.iota {dimensions = array<i32: 1>} : vector<128x16xi32>
    %c0_12 = arith.constant 0 : index
    %c0_13 = arith.constant 0 : index
    %25 = vector.load %arg1[%c0_12, %c0_13] : memref<128x1xi32, #tpu.memory_space<vmem>>, vector<128x1xi32>
    %26 = vector.broadcast %25 : vector<128x1xi32> to vector<128x16xi32>
    %27 = arith.cmpi eq, %24, %26 : vector<128x16xi32>
    %28 = arith.extui %27 : vector<128x16xi1> to vector<128x16xi32>
    %29 = arith.sitofp %28 : vector<128x16xi32> to vector<128x16xf32>
    %30 = arith.truncf %29 : vector<128x16xf32> to vector<128x16xbf16>
    %c0_14 = arith.constant 0 : index
    %c0_15 = arith.constant 0 : index
    %31 = vector.load %arg3[%c0_14, %c0_15] : memref<16x128xbf16, #tpu.memory_space<vmem>>, vector<16x128xbf16>
    %cst_16 = arith.constant dense<0.000000e+00> : vector<128x128xf32>
    %32 = tpu.matmul %30, %31, %cst_16 {dimension_numbers = #tpu.dot_dimension_numbers<[1], [0], [0], [1], [0, 0, 1, 1], [], []>} : vector<128x16xbf16>, vector<16x128xbf16>, vector<128x128xf32> -> vector<128x128xf32>
    %33 = arith.truncf %32 : vector<128x128xf32> to vector<128x128xbf16>
    %c0_17 = arith.constant 0 : index
    %c0_18 = arith.constant 0 : index
    %34 = vector.load %arg10[%c0_17, %c0_18] : memref<128x128xbf16, #tpu.memory_space<vmem>>, vector<128x128xbf16>
    %cst_19 = arith.constant dense<0.000000e+00> : vector<128x128xf32>
    %35 = tpu.matmul %33, %34, %cst_19 {dimension_numbers = #tpu.dot_dimension_numbers<[1], [0], [0], [1], [0, 0, 1, 1], [], []>} : vector<128x128xbf16>, vector<128x128xbf16>, vector<128x128xf32> -> vector<128x128xf32>
    %36 = arith.mulf %35, %23 : vector<128x128xf32>
    %c0_20 = arith.constant 0 : index
    %c0_21 = arith.constant 0 : index
    %37 = vector.load %arg5[%c0_20, %c0_21] : memref<128x128xbf16, #tpu.memory_space<vmem>>, vector<128x128xbf16>
    %c0_22 = arith.constant 0 : index
    %c0_23 = arith.constant 0 : index
    %38 = vector.load %arg11[%c0_22, %c0_23] : memref<128x128xbf16, #tpu.memory_space<vmem>>, vector<128x128xbf16>
    %cst_24 = arith.constant dense<0.000000e+00> : vector<128x128xf32>
    %39 = tpu.matmul %37, %38, %cst_24 {dimension_numbers = #tpu.dot_dimension_numbers<[1], [0], [0], [1], [0, 0, 1, 1], [], []>} : vector<128x128xbf16>, vector<128x128xbf16>, vector<128x128xf32> -> vector<128x128xf32>
    %40 = arith.addf %36, %39 : vector<128x128xf32>
    %41 = tpu.iota {dimensions = array<i32: 0>} : vector<16x128xi32>
    %c0_25 = arith.constant 0 : index
    %c0_26 = arith.constant 0 : index
    %42 = vector.load %arg2[%c0_25, %c0_26] : memref<1x128xi32, #tpu.memory_space<vmem>>, vector<1x128xi32>
    %43 = vector.broadcast %42 : vector<1x128xi32> to vector<16x128xi32>
    %44 = arith.cmpi eq, %41, %43 : vector<16x128xi32>
    %45 = arith.extui %44 : vector<16x128xi1> to vector<16x128xi32>
    %46 = arith.sitofp %45 : vector<16x128xi32> to vector<16x128xf32>
    %c0_27 = arith.constant 0 : index
    %c0_28 = arith.constant 0 : index
    %47 = vector.load %arg14[%c0_27, %c0_28] : memref<16x128xf32, #tpu.memory_space<vmem>>, vector<16x128xf32>
    %cst_29 = arith.constant dense<0.000000e+00> : vector<16x128xf32>
    %48 = tpu.matmul %46, %40, %cst_29 {dimension_numbers = #tpu.dot_dimension_numbers<[1], [0], [0], [1], [0, 0, 1, 1], [], []>} : vector<16x128xf32>, vector<128x128xf32>, vector<16x128xf32> -> vector<16x128xf32>
    %49 = arith.addf %47, %48 : vector<16x128xf32>
    %c0_30 = arith.constant 0 : index
    %c0_31 = arith.constant 0 : index
    %50 = vector.load %arg14[%c0_30, %c0_31] : memref<16x128xf32, #tpu.memory_space<vmem>>, vector<16x128xf32>
    tpu.vector_store %arg14[%c0_30, %c0_31], %49 {strides = array<i32>} : memref<16x128xf32, #tpu.memory_space<vmem>>, vector<16x128xf32>,
    %c1_i32 = arith.constant 1 : i32
    %51 = arith.cmpi eq, %arg0, %c1_i32 : i32
    %52 = arith.extui %51 : i1 to i32
    %c0_i32_32 = arith.constant 0 : i32
    %53 = arith.cmpi ne, %52, %c0_i32_32 : i32
    scf.if %53 {
      %c0_33 = arith.constant 0 : index
      %c0_34 = arith.constant 0 : index
      %54 = vector.load %arg3[%c0_33, %c0_34] : memref<16x128xbf16, #tpu.memory_space<vmem>>, vector<16x128xbf16>
      %c0_35 = arith.constant 0 : index
      %c0_36 = arith.constant 0 : index
      %55 = vector.load %arg12[%c0_35, %c0_36] : memref<128x128xbf16, #tpu.memory_space<vmem>>, vector<128x128xbf16>
      %cst_37 = arith.constant dense<0.000000e+00> : vector<16x128xf32>
      %56 = tpu.matmul %54, %55, %cst_37 {dimension_numbers = #tpu.dot_dimension_numbers<[1], [0], [0], [1], [0, 0, 1, 1], [], []>} : vector<16x128xbf16>, vector<128x128xbf16>, vector<16x128xf32> -> vector<16x128xf32>
      %c0_38 = arith.constant 0 : index
      %c0_39 = arith.constant 0 : index
      %57 = vector.load %arg4[%c0_38, %c0_39] : memref<16x128xbf16, #tpu.memory_space<vmem>>, vector<16x128xbf16>
      %c0_40 = arith.constant 0 : index
      %c0_41 = arith.constant 0 : index
      %58 = vector.load %arg13[%c0_40, %c0_41] : memref<128x128xbf16, #tpu.memory_space<vmem>>, vector<128x128xbf16>
      %cst_42 = arith.constant dense<0.000000e+00> : vector<16x128xf32>
      %59 = tpu.matmul %57, %58, %cst_42 {dimension_numbers = #tpu.dot_dimension_numbers<[1], [0], [0], [1], [0, 0, 1, 1], [], []>} : vector<16x128xbf16>, vector<128x128xbf16>, vector<16x128xf32> -> vector<16x128xf32>
      %60 = arith.addf %56, %59 : vector<16x128xf32>
      %c0_43 = arith.constant 0 : index
      %c0_44 = arith.constant 0 : index
      %61 = vector.load %arg14[%c0_43, %c0_44] : memref<16x128xf32, #tpu.memory_space<vmem>>, vector<16x128xf32>
      %62 = arith.addf %60, %61 : vector<16x128xf32>
      %63 = arith.negf %62 : vector<16x128xf32>
      %64 = math.exp %63 : vector<16x128xf32>
      %cst_45 = arith.constant 1.000000e+00 : f32
      %65 = vector.broadcast %cst_45 : f32 to vector<16x128xf32>
      %66 = arith.addf %65, %64 : vector<16x128xf32>
      %67 = arith.divf %65, %66 : vector<16x128xf32>
      %68 = arith.mulf %62, %67 : vector<16x128xf32>
      %c0_46 = arith.constant 0 : index
      %c0_47 = arith.constant 0 : index
      %69 = vector.load %arg14[%c0_46, %c0_47] : memref<16x128xf32, #tpu.memory_space<vmem>>, vector<16x128xf32>
      tpu.vector_store %arg14[%c0_46, %c0_47], %68 {strides = array<i32>} : memref<16x128xf32, #tpu.memory_space<vmem>>, vector<16x128xf32>,
    } else {
    }
    return
  }
  func.func @transform_0(%arg0: i32) -> (i32, i32) {
    %c0_i32 = arith.constant 0 : i32
    %c0_i32_0 = arith.constant 0 : i32
    return %arg0, %c0_i32 : i32, i32
  }
  func.func @transform_1(%arg0: i32) -> (i32, i32) {
    %c0_i32 = arith.constant 0 : i32
    %c0_i32_0 = arith.constant 0 : i32
    return %c0_i32, %arg0 : i32, i32
  }
  func.func @transform_2(%arg0: i32) -> (i32, i32) {
    %c0_i32 = arith.constant 0 : i32
    %c0_i32_0 = arith.constant 0 : i32
    %c0_i32_1 = arith.constant 0 : i32
    return %c0_i32, %c0_i32_0 : i32, i32
  }
  func.func @transform_3(%arg0: i32) -> (i32, i32) {
    %c0_i32 = arith.constant 0 : i32
    %c0_i32_0 = arith.constant 0 : i32
    %c0_i32_1 = arith.constant 0 : i32
    return %c0_i32, %c0_i32_0 : i32, i32
  }
  func.func @transform_4(%arg0: i32) -> (i32, i32) {
    %c0_i32 = arith.constant 0 : i32
    %c0_i32_0 = arith.constant 0 : i32
    return %arg0, %c0_i32 : i32, i32
  }
  func.func @transform_5(%arg0: i32) -> (i32, i32) {
    %c0_i32 = arith.constant 0 : i32
    %c0_i32_0 = arith.constant 0 : i32
    return %arg0, %c0_i32 : i32, i32
  }
  func.func @transform_6(%arg0: i32) -> (i32, i32) {
    %c0_i32 = arith.constant 0 : i32
    %c0_i32_0 = arith.constant 0 : i32
    %c0_i32_1 = arith.constant 0 : i32
    return %c0_i32, %c0_i32_0 : i32, i32
  }
  func.func @transform_7(%arg0: i32) -> (i32, i32) {
    %c0_i32 = arith.constant 0 : i32
    %c0_i32_0 = arith.constant 0 : i32
    %c0_i32_1 = arith.constant 0 : i32
    return %c0_i32, %c0_i32_0 : i32, i32
  }
  func.func @transform_8(%arg0: i32) -> (i32, i32) {
    %c0_i32 = arith.constant 0 : i32
    %c0_i32_0 = arith.constant 0 : i32
    %c0_i32_1 = arith.constant 0 : i32
    return %c0_i32, %c0_i32_0 : i32, i32
  }
  func.func @transform_9(%arg0: i32) -> (i32, i32) {
    %c0_i32 = arith.constant 0 : i32
    %c0_i32_0 = arith.constant 0 : i32
    %c0_i32_1 = arith.constant 0 : i32
    return %c0_i32, %c0_i32_0 : i32, i32
  }
  func.func @transform_10(%arg0: i32) -> (i32, i32) {
    %c0_i32 = arith.constant 0 : i32
    %c0_i32_0 = arith.constant 0 : i32
    %c0_i32_1 = arith.constant 0 : i32
    return %c0_i32, %c0_i32_0 : i32, i32
  }
  func.func @transform_11(%arg0: i32) -> (i32, i32) {
    %c0_i32 = arith.constant 0 : i32
    %c0_i32_0 = arith.constant 0 : i32
    %c0_i32_1 = arith.constant 0 : i32
    return %c0_i32, %c0_i32_0 : i32, i32
  }
  func.func @transform_12(%arg0: i32) -> (i32, i32) {
    %c0_i32 = arith.constant 0 : i32
    %c0_i32_0 = arith.constant 0 : i32
    %c0_i32_1 = arith.constant 0 : i32
    return %c0_i32, %c0_i32_0 : i32, i32
  }
  func.func @transform_13(%arg0: i32) -> (i32, i32) {
    %c0_i32 = arith.constant 0 : i32
    %c0_i32_0 = arith.constant 0 : i32
    %c0_i32_1 = arith.constant 0 : i32
    return %c0_i32, %c0_i32_0 : i32, i32
  }
}

</mosaic_0001>

<llo_original>
// kernel: tpu_custom_call.1
$region0: #{tpu_custom_call.1}
  #allocation0 [shape = 'u32[]', space=smem, size = 0x4, offset = 0x4, fixed_abs, tag = 'smem constant byte address 0x4 - core index']
  #allocation1 [shape = 'u32[144,128]{1,0:T(1,128)}', space=vmem, size = 0x12000, scoped, tag = 'internal scratch']
  %s0 = inlined_call_operand.vmem [shape: s32[256,1], index: 0, kind: input, shape index: {}]
  %s1 = inlined_call_operand.vmem [shape: s32[1,256], index: 1, kind: input, shape index: {}]
  %s2 = inlined_call_operand.hbm [shape: bf16[16,128], index: 2, kind: input, shape index: {}]
  %s3 = inlined_call_operand.hbm [shape: bf16[16,128], index: 3, kind: input, shape index: {}]
  %s4 = inlined_call_operand.vmem [shape: bf16[256,128], index: 4, kind: input, shape index: {}]
  %s5 = inlined_call_operand.vmem [shape: bf16[256,128], index: 5, kind: input, shape index: {}]
  %s6 = inlined_call_operand.hbm [shape: bf16[128,128], index: 6, kind: input, shape index: {}]
  %s7 = inlined_call_operand.hbm [shape: bf16[128,128], index: 7, kind: input, shape index: {}]
  %s8 = inlined_call_operand.hbm [shape: bf16[128,128], index: 8, kind: input, shape index: {}]
  %s9 = inlined_call_operand.hbm [shape: bf16[128,128], index: 9, kind: input, shape index: {}]
  %s10 = inlined_call_operand.hbm [shape: bf16[128,128], index: 10, kind: input, shape index: {}]
  %s11 = inlined_call_operand.hbm [shape: bf16[128,128], index: 11, kind: input, shape index: {}]
  %s12 = inlined_call_operand.hbm [shape: bf16[128,128], index: 12, kind: input, shape index: {}]
  %s13 = inlined_call_operand.hbm [shape: f32[16,128], index: 13, kind: output, shape index: {}]
  %s14 = sld [smem:[#allocation0]]
  $region129: #{tpu_custom_call.1} parent=0
    _
  %s16 = ssub.s32 1, %s14
  %s17 = scalar_select 0, %s16, %s14
  $region1: #{tpu_custom_call.1} parent=0
    #allocation2 [shape = 'u8[4096]{0}', space=vmem, size = 0x1000, scoped, tag = 'input window, operand 2, single buffered']
    #allocation3 [shape = 's32[2]{0}', space=sflag, size = 0x8, scoped, tag = 'scoped memory for tpu_custom_call.1']
    #allocation4 [shape = 's32[2]{0}', space=sflag, size = 0x8, scoped, tag = 'scoped memory for tpu_custom_call.1']
    #allocation5 [shape = 'u8[4096]{0}', space=vmem, size = 0x1000, scoped, tag = 'input window, operand 3, single buffered']
    #allocation6 [shape = 's32[1]{0}', space=sflag, size = 0x4, scoped, tag = 'scoped memory for tpu_custom_call.1']
    #allocation7 [shape = 'u8[32768]{0}', space=vmem, size = 0x8000, scoped, tag = 'input window, operand 6, single buffered']
    #allocation8 [shape = 'u8[32768]{0}', space=vmem, size = 0x8000, scoped, tag = 'input window, operand 7, single buffered']
    #allocation9 [shape = 's32[1]{0}', space=sflag, size = 0x4, scoped, tag = 'scoped memory for tpu_custom_call.1']
    #allocation10 [shape = 'u8[32768]{0}', space=vmem, size = 0x8000, scoped, tag = 'input window, operand 8, single buffered']
    #allocation11 [shape = 'u8[32768]{0}', space=vmem, size = 0x8000, scoped, tag = 'input window, operand 9, single buffered']
    #allocation12 [shape = 's32[1]{0}', space=sflag, size = 0x4, scoped, tag = 'scoped memory for tpu_custom_call.1']
    #allocation13 [shape = 'u8[32768]{0}', space=vmem, size = 0x8000, scoped, tag = 'input window, operand 10, single buffered']
    #allocation14 [shape = 'u8[32768]{0}', space=vmem, size = 0x8000, scoped, tag = 'input window, operand 11, single buffered']
    #allocation15 [shape = 's32[1]{0}', space=sflag, size = 0x4, scoped, tag = 'scoped memory for tpu_custom_call.1']
    #allocation16 [shape = 'u8[32768]{0}', space=vmem, size = 0x8000, scoped, tag = 'input window, operand 12, single buffered']
    #allocation17 [shape = 'u8[8192]{0}', space=vmem, size = 0x2000, scoped, tag = 'output window, operand 0, single buffered']
    %18 = vsyncpa [#allocation3], 0
    %19 = vsyncpa [#allocation6], 0
    %20 = vsyncpa [#allocation9], 0
    %21 = vsyncpa [#allocation12], 0
    %22 = vsyncpa [#allocation15], 0
    %23 = vsyncpa [#allocation4], 0
    loop: start=0, step=1, limit=4
    $region2: #{tpu_custom_call.1} parent=1 // loop_pre_header
      _
    $region3: #{tpu_custom_call.1} parent=1 // loop_header
      %s25 = sphi 0, %s29
      %p26 = scmp.ge.s32.totalorder %s25, 4
      %s35 = sphi 0, %s37
      %s38 = sphi 0, %s35
      %s39 = sphi 0, %s38
      %s55 = sphi 0, %s39
      %s61 = sphi 0, %s63
      %s64 = sphi 0, %s61
      %s65 = sphi 0, %s64
      %s81 = sphi 0, %s65
      %s85 = sphi 0, %s85
      %s87 = sphi 0, %s85
      %s88 = sphi 0, %s87
      %s102 = sphi 0, %s88
      %s106 = sphi 0, %s106
      %s108 = sphi 0, %s106
      %s109 = sphi 0, %s108
      %s123 = sphi 0, %s109
      %s129 = sphi 0, %s131
      %s132 = sphi 0, %s129
      %s133 = sphi 0, %s132
      %s149 = sphi 0, %s133
      %s155 = sphi 0, %s157
      %s158 = sphi 0, %s155
      %s159 = sphi 0, %s158
      %s175 = sphi 0, %s159
      %s179 = sphi 0, %s179
      %s181 = sphi 0, %s179
      %s182 = sphi 0, %s181
      %s196 = sphi 0, %s182
      %s200 = sphi 0, %s200
      %s202 = sphi 0, %s200
      %s203 = sphi 0, %s202
      %s217 = sphi 0, %s203
      %s221 = sphi 0, %s221
      %s223 = sphi 0, %s221
      %s224 = sphi 0, %s223
      %s238 = sphi 0, %s224
      %s242 = sphi 0, %s242
      %s244 = sphi 0, %s242
      %s245 = sphi 0, %s244
      %s259 = sphi 0, %s245
      %s263 = sphi 0, %s263
      %s265 = sphi 0, %s263
      %s266 = sphi 0, %s265
      %s280 = sphi 0, %s266
      %s284 = sphi 0, %s284
      %s286 = sphi 0, %s284
      %s287 = sphi 0, %s286
      %s301 = sphi 0, %s287
      %s305 = sphi 0, %s305
      %s307 = sphi 0, %s305
      %s308 = sphi 0, %s307
      %s322 = sphi 0, %s308
      %s326 = sphi 0, %s326
      %s328 = sphi 0, %s326
      %s329 = sphi 0, %s328
      %s343 = sphi 0, %s329
    $region4: #{tpu_custom_call.1} parent=1 // loop_header_branch
      %28 = sbr.rel (%p26) target = $region8
    $region5: #{tpu_custom_call.1} parent=1 // loop_body
      %s30 = ssub.s32 %s25, 1
      %s31 = ssub.s32 %s25, 2
      %s32 = sadd.s32 %s25, 1
      %s33 = ssub.s32 %s25, %s32
      %p34 = scmp.eq.s32.totalorder %s33, 0
      %s36 = sadd.s32 %s35, 1
      %s37 = scalar_select %p34, %s35, %s36
      %p40 = pneg %p34
      %p41 = scmp.eq.s32.totalorder %s25, 1
      %p42 = por %p40, %p41
      %p43 = scmp.ne.s32.totalorder %s35, %s38
      %p44 = scmp.eq.s32.totalorder %s25, 0
      %p45 = por %p43, %p44
      %p46 = scmp.ne.s32.totalorder %s35, %s38
      %p47 = scmp.eq.s32.totalorder %s30, 1
      %p48 = por %p46, %p47
      %p49 = scmp.ne.s32.totalorder %s38, %s39
      %p50 = scmp.eq.s32.totalorder %s30, 0
      %p51 = por %p49, %p50
      %p52 = scmp.ne.s32.totalorder %s38, %s39
      %p53 = scmp.eq.s32.totalorder %s31, 1
      %p54 = por %p52, %p53
      %p56 = scmp.ne.s32.totalorder %s39, %s55
      %p57 = scmp.eq.s32.totalorder %s31, 0
      %p58 = por %p56, %p57
      %s59 = ssub.s32 %s25, %s32
      %p60 = scmp.eq.s32.totalorder %s59, 0
      %s62 = sadd.s32 %s61, 1
      %s63 = scalar_select %p60, %s61, %s62
      %p66 = pneg %p60
      %p67 = scmp.eq.s32.totalorder %s25, 1
      %p68 = por %p66, %p67
      %p69 = scmp.ne.s32.totalorder %s61, %s64
      %p70 = scmp.eq.s32.totalorder %s25, 0
      %p71 = por %p69, %p70
      %p72 = scmp.ne.s32.totalorder %s61, %s64
      %p73 = scmp.eq.s32.totalorder %s30, 1
      %p74 = por %p72, %p73
      %p75 = scmp.ne.s32.totalorder %s64, %s65
      %p76 = scmp.eq.s32.totalorder %s30, 0
      %p77 = por %p75, %p76
      %p78 = scmp.ne.s32.totalorder %s64, %s65
      %p79 = scmp.eq.s32.totalorder %s31, 1
      %p80 = por %p78, %p79
      %p82 = scmp.ne.s32.totalorder %s65, %s81
      %p83 = scmp.eq.s32.totalorder %s31, 0
      %p84 = por %p82, %p83
      %s86 = sadd.s32 %s85, 1
      %p89 = scmp.eq.s32.totalorder %s25, 1
      %p90 = scmp.ne.s32.totalorder %s85, %s87
      %p91 = scmp.eq.s32.totalorder %s25, 0
      %p92 = por %p90, %p91
      %p93 = scmp.ne.s32.totalorder %s85, %s87
      %p94 = scmp.eq.s32.totalorder %s30, 1
      %p95 = por %p93, %p94
      %p96 = scmp.ne.s32.totalorder %s87, %s88
      %p97 = scmp.eq.s32.totalorder %s30, 0
      %p98 = por %p96, %p97
      %p99 = scmp.ne.s32.totalorder %s87, %s88
      %p100 = scmp.eq.s32.totalorder %s31, 1
      %p101 = por %p99, %p100
      %p103 = scmp.ne.s32.totalorder %s88, %s102
      %p104 = scmp.eq.s32.totalorder %s31, 0
      %p105 = por %p103, %p104
      %s107 = sadd.s32 %s106, 1
      %p110 = scmp.eq.s32.totalorder %s25, 1
      %p111 = scmp.ne.s32.totalorder %s106, %s108
      %p112 = scmp.eq.s32.totalorder %s25, 0
      %p113 = por %p111, %p112
      %p114 = scmp.ne.s32.totalorder %s106, %s108
      %p115 = scmp.eq.s32.totalorder %s30, 1
      %p116 = por %p114, %p115
      %p117 = scmp.ne.s32.totalorder %s108, %s109
      %p118 = scmp.eq.s32.totalorder %s30, 0
      %p119 = por %p117, %p118
      %p120 = scmp.ne.s32.totalorder %s108, %s109
      %p121 = scmp.eq.s32.totalorder %s31, 1
      %p122 = por %p120, %p121
      %p124 = scmp.ne.s32.totalorder %s109, %s123
      %p125 = scmp.eq.s32.totalorder %s31, 0
      %p126 = por %p124, %p125
      %s127 = ssub.s32 %s25, %s32
      %p128 = scmp.eq.s32.totalorder %s127, 0
      %s130 = sadd.s32 %s129, 1
      %s131 = scalar_select %p128, %s129, %s130
      %p134 = pneg %p128
      %p135 = scmp.eq.s32.totalorder %s25, 1
      %p136 = por %p134, %p135
      %p137 = scmp.ne.s32.totalorder %s129, %s132
      %p138 = scmp.eq.s32.totalorder %s25, 0
      %p139 = por %p137, %p138
      %p140 = scmp.ne.s32.totalorder %s129, %s132
      %p141 = scmp.eq.s32.totalorder %s30, 1
      %p142 = por %p140, %p141
      %p143 = scmp.ne.s32.totalorder %s132, %s133
      %p144 = scmp.eq.s32.totalorder %s30, 0
      %p145 = por %p143, %p144
      %p146 = scmp.ne.s32.totalorder %s132, %s133
      %p147 = scmp.eq.s32.totalorder %s31, 1
      %p148 = por %p146, %p147
      %p150 = scmp.ne.s32.totalorder %s133, %s149
      %p151 = scmp.eq.s32.totalorder %s31, 0
      %p152 = por %p150, %p151
      %s153 = ssub.s32 %s25, %s32
      %p154 = scmp.eq.s32.totalorder %s153, 0
      %s156 = sadd.s32 %s155, 1
      %s157 = scalar_select %p154, %s155, %s156
      %p160 = pneg %p154
      %p161 = scmp.eq.s32.totalorder %s25, 1
      %p162 = por %p160, %p161
      %p163 = scmp.ne.s32.totalorder %s155, %s158
      %p164 = scmp.eq.s32.totalorder %s25, 0
      %p165 = por %p163, %p164
      %p166 = scmp.ne.s32.totalorder %s155, %s158
      %p167 = scmp.eq.s32.totalorder %s30, 1
      %p168 = por %p166, %p167
      %p169 = scmp.ne.s32.totalorder %s158, %s159
      %p170 = scmp.eq.s32.totalorder %s30, 0
      %p171 = por %p169, %p170
      %p172 = scmp.ne.s32.totalorder %s158, %s159
      %p173 = scmp.eq.s32.totalorder %s31, 1
      %p174 = por %p172, %p173
      %p176 = scmp.ne.s32.totalorder %s159, %s175
      %p177 = scmp.eq.s32.totalorder %s31, 0
      %p178 = por %p176, %p177
      %s180 = sadd.s32 %s179, 1
      %p183 = scmp.eq.s32.totalorder %s25, 1
      %p184 = scmp.ne.s32.totalorder %s179, %s181
      %p185 = scmp.eq.s32.totalorder %s25, 0
      %p186 = por %p184, %p185
      %p187 = scmp.ne.s32.totalorder %s179, %s181
      %p188 = scmp.eq.s32.totalorder %s30, 1
      %p189 = por %p187, %p188
      %p190 = scmp.ne.s32.totalorder %s181, %s182
      %p191 = scmp.eq.s32.totalorder %s30, 0
      %p192 = por %p190, %p191
      %p193 = scmp.ne.s32.totalorder %s181, %s182
      %p194 = scmp.eq.s32.totalorder %s31, 1
      %p195 = por %p193, %p194
      %p197 = scmp.ne.s32.totalorder %s182, %s196
      %p198 = scmp.eq.s32.totalorder %s31, 0
      %p199 = por %p197, %p198
      %s201 = sadd.s32 %s200, 1
      %p204 = scmp.eq.s32.totalorder %s25, 1
      %p205 = scmp.ne.s32.totalorder %s200, %s202
      %p206 = scmp.eq.s32.totalorder %s25, 0
      %p207 = por %p205, %p206
      %p208 = scmp.ne.s32.totalorder %s200, %s202
      %p209 = scmp.eq.s32.totalorder %s30, 1
      %p210 = por %p208, %p209
      %p211 = scmp.ne.s32.totalorder %s202, %s203
      %p212 = scmp.eq.s32.totalorder %s30, 0
      %p213 = por %p211, %p212
      %p214 = scmp.ne.s32.totalorder %s202, %s203
      %p215 = scmp.eq.s32.totalorder %s31, 1
      %p216 = por %p214, %p215
      %p218 = scmp.ne.s32.totalorder %s203, %s217
      %p219 = scmp.eq.s32.totalorder %s31, 0
      %p220 = por %p218, %p219
      %s222 = sadd.s32 %s221, 1
      %p225 = scmp.eq.s32.totalorder %s25, 1
      %p226 = scmp.ne.s32.totalorder %s221, %s223
      %p227 = scmp.eq.s32.totalorder %s25, 0
      %p228 = por %p226, %p227
      %p229 = scmp.ne.s32.totalorder %s221, %s223
      %p230 = scmp.eq.s32.totalorder %s30, 1
      %p231 = por %p229, %p230
      %p232 = scmp.ne.s32.totalorder %s223, %s224
      %p233 = scmp.eq.s32.totalorder %s30, 0
      %p234 = por %p232, %p233
      %p235 = scmp.ne.s32.totalorder %s223, %s224
      %p236 = scmp.eq.s32.totalorder %s31, 1
      %p237 = por %p235, %p236
      %p239 = scmp.ne.s32.totalorder %s224, %s238
      %p240 = scmp.eq.s32.totalorder %s31, 0
      %p241 = por %p239, %p240
      %s243 = sadd.s32 %s242, 1
      %p246 = scmp.eq.s32.totalorder %s25, 1
      %p247 = scmp.ne.s32.totalorder %s242, %s244
      %p248 = scmp.eq.s32.totalorder %s25, 0
      %p249 = por %p247, %p248
      %p250 = scmp.ne.s32.totalorder %s242, %s244
      %p251 = scmp.eq.s32.totalorder %s30, 1
      %p252 = por %p250, %p251
      %p253 = scmp.ne.s32.totalorder %s244, %s245
      %p254 = scmp.eq.s32.totalorder %s30, 0
      %p255 = por %p253, %p254
      %p256 = scmp.ne.s32.totalorder %s244, %s245
      %p257 = scmp.eq.s32.totalorder %s31, 1
      %p258 = por %p256, %p257
      %p260 = scmp.ne.s32.totalorder %s245, %s259
      %p261 = scmp.eq.s32.totalorder %s31, 0
      %p262 = por %p260, %p261
      %s264 = sadd.s32 %s263, 1
      %p267 = scmp.eq.s32.totalorder %s25, 1
      %p268 = scmp.ne.s32.totalorder %s263, %s265
      %p269 = scmp.eq.s32.totalorder %s25, 0
      %p270 = por %p268, %p269
      %p271 = scmp.ne.s32.totalorder %s263, %s265
      %p272 = scmp.eq.s32.totalorder %s30, 1
      %p273 = por %p271, %p272
      %p274 = scmp.ne.s32.totalorder %s265, %s266
      %p275 = scmp.eq.s32.totalorder %s30, 0
      %p276 = por %p274, %p275
      %p277 = scmp.ne.s32.totalorder %s265, %s266
      %p278 = scmp.eq.s32.totalorder %s31, 1
      %p279 = por %p277, %p278
      %p281 = scmp.ne.s32.totalorder %s266, %s280
      %p282 = scmp.eq.s32.totalorder %s31, 0
      %p283 = por %p281, %p282
      %s285 = sadd.s32 %s284, 1
      %p288 = scmp.eq.s32.totalorder %s25, 1
      %p289 = scmp.ne.s32.totalorder %s284, %s286
      %p290 = scmp.eq.s32.totalorder %s25, 0
      %p291 = por %p289, %p290
      %p292 = scmp.ne.s32.totalorder %s284, %s286
      %p293 = scmp.eq.s32.totalorder %s30, 1
      %p294 = por %p292, %p293
      %p295 = scmp.ne.s32.totalorder %s286, %s287
      %p296 = scmp.eq.s32.totalorder %s30, 0
      %p297 = por %p295, %p296
      %p298 = scmp.ne.s32.totalorder %s286, %s287
      %p299 = scmp.eq.s32.totalorder %s31, 1
      %p300 = por %p298, %p299
      %p302 = scmp.ne.s32.totalorder %s287, %s301
      %p303 = scmp.eq.s32.totalorder %s31, 0
      %p304 = por %p302, %p303
      %s306 = sadd.s32 %s305, 1
      %p309 = scmp.eq.s32.totalorder %s25, 1
      %p310 = scmp.ne.s32.totalorder %s305, %s307
      %p311 = scmp.eq.s32.totalorder %s25, 0
      %p312 = por %p310, %p311
      %p313 = scmp.ne.s32.totalorder %s305, %s307
      %p314 = scmp.eq.s32.totalorder %s30, 1
      %p315 = por %p313, %p314
      %p316 = scmp.ne.s32.totalorder %s307, %s308
      %p317 = scmp.eq.s32.totalorder %s30, 0
      %p318 = por %p316, %p317
      %p319 = scmp.ne.s32.totalorder %s307, %s308
      %p320 = scmp.eq.s32.totalorder %s31, 1
      %p321 = por %p319, %p320
      %p323 = scmp.ne.s32.totalorder %s308, %s322
      %p324 = scmp.eq.s32.totalorder %s31, 0
      %p325 = por %p323, %p324
      %s327 = sadd.s32 %s326, 1
      %p330 = scmp.eq.s32.totalorder %s25, 1
      %p331 = scmp.ne.s32.totalorder %s326, %s328
      %p332 = scmp.eq.s32.totalorder %s25, 0
      %p333 = por %p331, %p332
      %p334 = scmp.ne.s32.totalorder %s326, %s328
      %p335 = scmp.eq.s32.totalorder %s30, 1
      %p336 = por %p334, %p335
      %p337 = scmp.ne.s32.totalorder %s328, %s329
      %p338 = scmp.eq.s32.totalorder %s30, 0
      %p339 = por %p337, %p338
      %p340 = scmp.ne.s32.totalorder %s328, %s329
      %p341 = scmp.eq.s32.totalorder %s31, 1
      %p342 = por %p340, %p341
      %p344 = scmp.ne.s32.totalorder %s329, %s343
      %p345 = scmp.eq.s32.totalorder %s31, 0
      %p346 = por %p344, %p345
      %p347 = scmp.le.s32.totalorder 1, %s25
      %p348 = scmp.lt.s32.totalorder %s25, 3
      %p349 = pnand %p347, %p348
      %p350 = pneg %p349
      // Predicated region
      $region9: #{tpu_custom_call.1} parent=5 // pred_check
        _
      $region10: #{tpu_custom_call.1} parent=5 // pred_check_branch
        %352 = sbr.rel (%p349) target = $region12
      $region11: #{tpu_custom_call.1} parent=5 // pred_region
        %s353 = ssub.s32 %s25, 1
        // Predicated region
        $region13: #{tpu_custom_call.1} parent=11 // pred_check
          %p354 = pneg %p98
        $region14: #{tpu_custom_call.1} parent=11 // pred_check_branch
          %356 = sbr.rel (%p354) target = $region16
        $region15: #{tpu_custom_call.1} parent=11 // pred_region
          %s358 = ssub.s32 128, 128
          %359 = vsyncadd [#allocation3], %s358
          %s360 = sshll.u32 [#allocation2], 4
          %s361 = int_to_ptr.vmem [resolvable:$true] %s360
          %366 = dma.hbm_to_vmem [thread:$0]  %s2, 128, %s361, [#allocation3], 64, 64, 4
        $region16: #{tpu_custom_call.1} parent=11 // pred_fallthru
          _
        // Predicated region
        $region17: #{tpu_custom_call.1} parent=11 // pred_check
          %p367 = pneg %p119
        $region18: #{tpu_custom_call.1} parent=11 // pred_check_branch
          %369 = sbr.rel (%p367) target = $region20
        $region19: #{tpu_custom_call.1} parent=11 // pred_region
          %s371 = ssub.s32 128, 128
          %372 = vsyncadd [#allocation6], %s371
          %s373 = sshll.u32 [#allocation5], 4
          %s374 = int_to_ptr.vmem [resolvable:$true] %s373
          %379 = dma.hbm_to_vmem [thread:$0]  %s3, 128, %s374, [#allocation6], 64, 64, 4
        $region20: #{tpu_custom_call.1} parent=11 // pred_fallthru
          _
        // Predicated region
        $region21: #{tpu_custom_call.1} parent=11 // pred_check
          %p380 = pneg %p192
        $region22: #{tpu_custom_call.1} parent=11 // pred_check_branch
          %382 = sbr.rel (%p380) target = $region24
        $region23: #{tpu_custom_call.1} parent=11 // pred_region
          %s384 = ssub.s32 1024, 1024
          %385 = vsyncadd [#allocation6], %s384
          %s386 = sshll.u32 [#allocation7], 4
          %s387 = int_to_ptr.vmem [resolvable:$true] %s386
          %392 = dma.hbm_to_vmem [thread:$0]  %s6, 1024, %s387, [#allocation6], 64, 64, 4
        $region24: #{tpu_custom_call.1} parent=11 // pred_fallthru
          _
        // Predicated region
        $region25: #{tpu_custom_call.1} parent=11 // pred_check
          %p393 = pneg %p213
        $region26: #{tpu_custom_call.1} parent=11 // pred_check_branch
          %395 = sbr.rel (%p393) target = $region28
        $region27: #{tpu_custom_call.1} parent=11 // pred_region
          %s397 = ssub.s32 1024, 1024
          %398 = vsyncadd [#allocation9], %s397
          %s399 = sshll.u32 [#allocation8], 4
          %s400 = int_to_ptr.vmem [resolvable:$true] %s399
          %405 = dma.hbm_to_vmem [thread:$0]  %s7, 1024, %s400, [#allocation9], 64, 64, 4
        $region28: #{tpu_custom_call.1} parent=11 // pred_fallthru
          _
        // Predicated region
        $region29: #{tpu_custom_call.1} parent=11 // pred_check
          %p406 = pneg %p234
        $region30: #{tpu_custom_call.1} parent=11 // pred_check_branch
          %408 = sbr.rel (%p406) target = $region32
        $region31: #{tpu_custom_call.1} parent=11 // pred_region
          %s410 = ssub.s32 1024, 1024
          %411 = vsyncadd [#allocation9], %s410
          %s412 = sshll.u32 [#allocation10], 4
          %s413 = int_to_ptr.vmem [resolvable:$true] %s412
          %418 = dma.hbm_to_vmem [thread:$0]  %s8, 1024, %s413, [#allocation9], 64, 64, 4
        $region32: #{tpu_custom_call.1} parent=11 // pred_fallthru
          _
        // Predicated region
        $region33: #{tpu_custom_call.1} parent=11 // pred_check
          %p419 = pneg %p255
        $region34: #{tpu_custom_call.1} parent=11 // pred_check_branch
          %421 = sbr.rel (%p419) target = $region36
        $region35: #{tpu_custom_call.1} parent=11 // pred_region
          %s423 = ssub.s32 1024, 1024
          %424 = vsyncadd [#allocation12], %s423
          %s425 = sshll.u32 [#allocation11], 4
          %s426 = int_to_ptr.vmem [resolvable:$true] %s425
          %431 = dma.hbm_to_vmem [thread:$0]  %s9, 1024, %s426, [#allocation12], 64, 64, 4
        $region36: #{tpu_custom_call.1} parent=11 // pred_fallthru
          _
        // Predicated region
        $region37: #{tpu_custom_call.1} parent=11 // pred_check
          %p432 = pneg %p276
        $region38: #{tpu_custom_call.1} parent=11 // pred_check_branch
          %434 = sbr.rel (%p432) target = $region40
        $region39: #{tpu_custom_call.1} parent=11 // pred_region
          %s436 = ssub.s32 1024, 1024
          %437 = vsyncadd [#allocation12], %s436
          %s438 = sshll.u32 [#allocation13], 4
          %s439 = int_to_ptr.vmem [resolvable:$true] %s438
          %444 = dma.hbm_to_vmem [thread:$0]  %s10, 1024, %s439, [#allocation12], 64, 64, 4
        $region40: #{tpu_custom_call.1} parent=11 // pred_fallthru
          _
        // Predicated region
        $region41: #{tpu_custom_call.1} parent=11 // pred_check
          %p445 = pneg %p297
        $region42: #{tpu_custom_call.1} parent=11 // pred_check_branch
          %447 = sbr.rel (%p445) target = $region44
        $region43: #{tpu_custom_call.1} parent=11 // pred_region
          %s449 = ssub.s32 1024, 1024
          %450 = vsyncadd [#allocation15], %s449
          %s451 = sshll.u32 [#allocation14], 4
          %s452 = int_to_ptr.vmem [resolvable:$true] %s451
          %457 = dma.hbm_to_vmem [thread:$0]  %s11, 1024, %s452, [#allocation15], 64, 64, 4
        $region44: #{tpu_custom_call.1} parent=11 // pred_fallthru
          _
        // Predicated region
        $region45: #{tpu_custom_call.1} parent=11 // pred_check
          %p458 = pneg %p318
        $region46: #{tpu_custom_call.1} parent=11 // pred_check_branch
          %460 = sbr.rel (%p458) target = $region48
        $region47: #{tpu_custom_call.1} parent=11 // pred_region
          %s462 = ssub.s32 1024, 1024
          %463 = vsyncadd [#allocation15], %s462
          %s464 = sshll.u32 [#allocation16], 4
          %s465 = int_to_ptr.vmem [resolvable:$true] %s464
          %470 = dma.hbm_to_vmem [thread:$0]  %s12, 1024, %s465, [#allocation15], 64, 64, 4
        $region48: #{tpu_custom_call.1} parent=11 // pred_fallthru
          _
      $region12: #{tpu_custom_call.1} parent=5 // pred_fallthru
        _
      %p471 = scmp.lt.s32.totalorder %s25, 2
      // Predicated region
      $region49: #{tpu_custom_call.1} parent=5 // pred_check
        %p472 = pneg %p471
      $region50: #{tpu_custom_call.1} parent=5 // pred_check_branch
        %474 = sbr.rel (%p472) target = $region52
      $region51: #{tpu_custom_call.1} parent=5 // pred_region
        // Predicated region
        $region53: #{tpu_custom_call.1} parent=51 // pred_check
          %p475 = pneg %p45
        $region54: #{tpu_custom_call.1} parent=51 // pred_check_branch
          %477 = sbr.rel (%p475) target = $region56
        $region55: #{tpu_custom_call.1} parent=51 // pred_region
          %s478 = smul.u32 16, %s25
          %p479 = scmp.lt.s32.totalorder %s478, 31
          %s480 = scalar_select %p479, %s478, 31
          %s481 = smul.addr %s480, 8
          %s482 = scalar_lea.vmem %s0, %s481
          %s483 = smul.u32 16, %s25
        $region56: #{tpu_custom_call.1} parent=51 // pred_fallthru
          _
        // Predicated region
        $region57: #{tpu_custom_call.1} parent=51 // pred_check
          %p484 = pneg %p71
        $region58: #{tpu_custom_call.1} parent=51 // pred_check_branch
          %486 = sbr.rel (%p484) target = $region60
        $region59: #{tpu_custom_call.1} parent=51 // pred_region
          %p487 = scmp.lt.s32.totalorder %s25, 1
          %s488 = scalar_select %p487, %s25, 1
          %s489 = scalar_lea.vmem %s1, %s488
        $region60: #{tpu_custom_call.1} parent=51 // pred_fallthru
          _
        // Predicated region
        $region61: #{tpu_custom_call.1} parent=51 // pred_check
          %p490 = pneg %p139
        $region62: #{tpu_custom_call.1} parent=51 // pred_check_branch
          %492 = sbr.rel (%p490) target = $region64
        $region63: #{tpu_custom_call.1} parent=51 // pred_region
          %s493 = smul.u32 16, %s25
          %p494 = scmp.lt.s32.totalorder %s493, 31
          %s495 = scalar_select %p494, %s493, 31
          %s496 = smul.addr %s495, 4
          %s497 = scalar_lea.vmem %s4, %s496
          %s498 = smul.u32 16, %s25
        $region64: #{tpu_custom_call.1} parent=51 // pred_fallthru
          _
        // Predicated region
        $region65: #{tpu_custom_call.1} parent=51 // pred_check
          %p499 = pneg %p165
        $region66: #{tpu_custom_call.1} parent=51 // pred_check_branch
          %501 = sbr.rel (%p499) target = $region68
        $region67: #{tpu_custom_call.1} parent=51 // pred_region
          %s502 = smul.u32 16, %s25
          %p503 = scmp.lt.s32.totalorder %s502, 31
          %s504 = scalar_select %p503, %s502, 31
          %s505 = smul.addr %s504, 4
          %s506 = scalar_lea.vmem %s5, %s505
          %s507 = smul.u32 16, %s25
        $region68: #{tpu_custom_call.1} parent=51 // pred_fallthru
          _
      $region52: #{tpu_custom_call.1} parent=5 // pred_fallthru
        _
      %p508 = scmp.le.s32.totalorder 1, %s25
      %p509 = scmp.lt.s32.totalorder %s25, 3
      %p510 = pnand %p508, %p509
      %p511 = pneg %p510
      // Predicated region
      $region69: #{tpu_custom_call.1} parent=5 // pred_check
        _
      $region70: #{tpu_custom_call.1} parent=5 // pred_check_branch
        %513 = sbr.rel (%p510) target = $region72
      $region71: #{tpu_custom_call.1} parent=5 // pred_region
        %s514 = ssub.s32 %s25, 1
        // Predicated region
        $region73: #{tpu_custom_call.1} parent=71 // pred_check
          %p515 = pneg %p98
        $region74: #{tpu_custom_call.1} parent=71 // pred_check_branch
          %517 = sbr.rel (%p515) target = $region76
        $region75: #{tpu_custom_call.1} parent=71 // pred_region
          %518 = dma.done [#allocation3], 128
        $region76: #{tpu_custom_call.1} parent=71 // pred_fallthru
          _
        // Predicated region
        $region77: #{tpu_custom_call.1} parent=71 // pred_check
          %p519 = pneg %p119
        $region78: #{tpu_custom_call.1} parent=71 // pred_check_branch
          %521 = sbr.rel (%p519) target = $region80
        $region79: #{tpu_custom_call.1} parent=71 // pred_region
          %522 = dma.done [#allocation6], 128
        $region80: #{tpu_custom_call.1} parent=71 // pred_fallthru
          _
        // Predicated region
        $region81: #{tpu_custom_call.1} parent=71 // pred_check
          %p523 = pneg %p192
        $region82: #{tpu_custom_call.1} parent=71 // pred_check_branch
          %525 = sbr.rel (%p523) target = $region84
        $region83: #{tpu_custom_call.1} parent=71 // pred_region
          %526 = dma.done [#allocation6], 1024
        $region84: #{tpu_custom_call.1} parent=71 // pred_fallthru
          _
        // Predicated region
        $region85: #{tpu_custom_call.1} parent=71 // pred_check
          %p527 = pneg %p213
        $region86: #{tpu_custom_call.1} parent=71 // pred_check_branch
          %529 = sbr.rel (%p527) target = $region88
        $region87: #{tpu_custom_call.1} parent=71 // pred_region
          %530 = dma.done [#allocation9], 1024
        $region88: #{tpu_custom_call.1} parent=71 // pred_fallthru
          _
        // Predicated region
        $region89: #{tpu_custom_call.1} parent=71 // pred_check
          %p531 = pneg %p234
        $region90: #{tpu_custom_call.1} parent=71 // pred_check_branch
          %533 = sbr.rel (%p531) target = $region92
        $region91: #{tpu_custom_call.1} parent=71 // pred_region
          %534 = dma.done [#allocation9], 1024
        $region92: #{tpu_custom_call.1} parent=71 // pred_fallthru
          _
        // Predicated region
        $region93: #{tpu_custom_call.1} parent=71 // pred_check
          %p535 = pneg %p255
        $region94: #{tpu_custom_call.1} parent=71 // pred_check_branch
          %537 = sbr.rel (%p535) target = $region96
        $region95: #{tpu_custom_call.1} parent=71 // pred_region
          %538 = dma.done [#allocation12], 1024
        $region96: #{tpu_custom_call.1} parent=71 // pred_fallthru
          _
        // Predicated region
        $region97: #{tpu_custom_call.1} parent=71 // pred_check
          %p539 = pneg %p276
        $region98: #{tpu_custom_call.1} parent=71 // pred_check_branch
          %541 = sbr.rel (%p539) target = $region100
        $region99: #{tpu_custom_call.1} parent=71 // pred_region
          %542 = dma.done [#allocation12], 1024
        $region100: #{tpu_custom_call.1} parent=71 // pred_fallthru
          _
        // Predicated region
        $region101: #{tpu_custom_call.1} parent=71 // pred_check
          %p543 = pneg %p297
        $region102: #{tpu_custom_call.1} parent=71 // pred_check_branch
          %545 = sbr.rel (%p543) target = $region104
        $region103: #{tpu_custom_call.1} parent=71 // pred_region
          %546 = dma.done [#allocation15], 1024
        $region104: #{tpu_custom_call.1} parent=71 // pred_fallthru
          _
        // Predicated region
        $region105: #{tpu_custom_call.1} parent=71 // pred_check
          %p547 = pneg %p318
        $region106: #{tpu_custom_call.1} parent=71 // pred_check_branch
          %549 = sbr.rel (%p547) target = $region108
        $region107: #{tpu_custom_call.1} parent=71 // pred_region
          %550 = dma.done [#allocation15], 1024
        $region108: #{tpu_custom_call.1} parent=71 // pred_fallthru
          _
        %s551 = smul.u32 16, %s30
        %p552 = scmp.lt.s32.totalorder %s551, 31
        %s553 = scalar_select %p552, %s551, 31
        %s554 = smul.addr %s553, 8
        %s555 = scalar_lea.vmem %s0, %s554
        %p556 = pneg %p51
        %p557 = pneg %p48
        %p558 = scmp.lt.s32.totalorder %s30, 1
        %s559 = scalar_select %p558, %s30, 1
        %s560 = scalar_lea.vmem %s1, %s559
        %p561 = pneg %p77
        %p562 = pneg %p74
        %p563 = pneg %p98
        %p564 = pneg %p95
        %p565 = pneg %p119
        %p566 = pneg %p116
        %s567 = smul.u32 16, %s30
        %p568 = scmp.lt.s32.totalorder %s567, 31
        %s569 = scalar_select %p568, %s567, 31
        %s570 = smul.addr %s569, 4
        %s571 = scalar_lea.vmem %s4, %s570
        %p572 = pneg %p145
        %p573 = pneg %p142
        %s574 = smul.u32 16, %s30
        %p575 = scmp.lt.s32.totalorder %s574, 31
        %s576 = scalar_select %p575, %s574, 31
        %s577 = smul.addr %s576, 4
        %s578 = scalar_lea.vmem %s5, %s577
        %p579 = pneg %p171
        %p580 = pneg %p168
        %p581 = pneg %p192
        %p582 = pneg %p189
        %p583 = pneg %p213
        %p584 = pneg %p210
        %p585 = pneg %p234
        %p586 = pneg %p231
        %p587 = pneg %p255
        %p588 = pneg %p252
        %p589 = pneg %p276
        %p590 = pneg %p273
        %p591 = pneg %p297
        %p592 = pneg %p294
        %p593 = pneg %p318
        %p594 = pneg %p315
        %p595 = pneg %p339
        %p596 = pneg %p336
        %s597 = smul.u32 16, %s30
        %p598 = scmp.lt.s32.totalorder %s597, 31
        %s599 = scalar_select %p598, %s597, 31
        %s600 = smul.addr %s599, 8
        %s601 = scalar_lea.vmem %s0, %s600
        %s602 = smul.u32 16, %s30
        %p603 = scmp.lt.s32.totalorder %s30, 1
        %s604 = scalar_select %p603, %s30, 1
        %s605 = scalar_lea.vmem %s1, %s604
        %s606 = smul.u32 16, %s30
        %p607 = scmp.lt.s32.totalorder %s606, 31
        %s608 = scalar_select %p607, %s606, 31
        %s609 = smul.addr %s608, 4
        %s610 = scalar_lea.vmem %s4, %s609
        %s611 = smul.u32 16, %s30
        %s612 = smul.u32 16, %s30
        %p613 = scmp.lt.s32.totalorder %s612, 31
        %s614 = scalar_select %p613, %s612, 31
        %s615 = smul.addr %s614, 4
        %s616 = scalar_lea.vmem %s5, %s615
        %s617 = smul.u32 16, %s30
        %p619 = scmp.eq.s32.totalorder %s30, 0
        // Predicated region
        $region109: #{tpu_custom_call.1} parent=71 // pred_check
          %p620 = pneg %p619
        $region110: #{tpu_custom_call.1} parent=71 // pred_check_branch
          %622 = sbr.rel (%p620) target = $region112
        $region111: #{tpu_custom_call.1} parent=71 // pred_region
          %623 = vst [vmem:[#allocation17] sm:$0xff] 0.0
          %624 = vst [vmem:[#allocation17 + $0x8] sm:$0xff] 0.0
        $region112: #{tpu_custom_call.1} parent=71 // pred_fallthru
          _
        %v625 = vld [vmem:[%s616] sm:$0xf]
        %v626 = vld [vmem:[%s616 + $0x4] sm:$0xf]
        %v627 = vld [vmem:[%s616 + $0x8] sm:$0xf]
        %v628 = vld [vmem:[%s616 + $0xc] sm:$0xf]
        %v629 = vld [vmem:[%s616 + $0x10] sm:$0xf]
        %v630 = vld [vmem:[%s616 + $0x14] sm:$0xf]
        %v631 = vld [vmem:[%s616 + $0x18] sm:$0xf]
        %v632 = vld [vmem:[%s616 + $0x1c] sm:$0xf]
        %v633 = vld [vmem:[%s616 + $0x20] sm:$0xf]
        %v634 = vld [vmem:[%s616 + $0x24] sm:$0xf]
        %v635 = vld [vmem:[%s616 + $0x28] sm:$0xf]
        %v636 = vld [vmem:[%s616 + $0x2c] sm:$0xf]
        %v637 = vld [vmem:[%s616 + $0x30] sm:$0xf]
        %v638 = vld [vmem:[%s616 + $0x34] sm:$0xf]
        %v639 = vld [vmem:[%s616 + $0x38] sm:$0xf]
        %v640 = vld [vmem:[%s616 + $0x3c] sm:$0xf]
        %v641 = vld [vmem:[#allocation7] sm:$0xf]
        %v642 = vld [vmem:[#allocation7 + $0x4] sm:$0xf]
        %v643 = vld [vmem:[#allocation7 + $0x8] sm:$0xf]
        %v644 = vld [vmem:[#allocation7 + $0xc] sm:$0xf]
        %v645 = vld [vmem:[#allocation7 + $0x10] sm:$0xf]
        %v646 = vld [vmem:[#allocation7 + $0x14] sm:$0xf]
        %v647 = vld [vmem:[#allocation7 + $0x18] sm:$0xf]
        %v648 = vld [vmem:[#allocation7 + $0x1c] sm:$0xf]
        %v649 = vld [vmem:[#allocation7 + $0x20] sm:$0xf]
        %v650 = vld [vmem:[#allocation7 + $0x24] sm:$0xf]
        %v651 = vld [vmem:[#allocation7 + $0x28] sm:$0xf]
        %v652 = vld [vmem:[#allocation7 + $0x2c] sm:$0xf]
        %v653 = vld [vmem:[#allocation7 + $0x30] sm:$0xf]
        %v654 = vld [vmem:[#allocation7 + $0x34] sm:$0xf]
        %v655 = vld [vmem:[#allocation7 + $0x38] sm:$0xf]
        %v656 = vld [vmem:[#allocation7 + $0x3c] sm:$0xf]
        %v673 = vunpack.c.l.b16 %v625
        %v674 = vunpack.c.l.b16 %v626
        %v675 = vunpack.c.l.b16 %v627
        %v676 = vunpack.c.l.b16 %v628
        %v677 = vunpack.c.l.b16 %v629
        %v678 = vunpack.c.l.b16 %v630
        %v679 = vunpack.c.l.b16 %v631
        %v680 = vunpack.c.l.b16 %v632
        %v681 = vunpack.c.l.b16 %v633
        %v682 = vunpack.c.l.b16 %v634
        %v683 = vunpack.c.l.b16 %v635
        %v684 = vunpack.c.l.b16 %v636
        %v685 = vunpack.c.l.b16 %v637
        %v686 = vunpack.c.l.b16 %v638
        %v687 = vunpack.c.l.b16 %v639
        %v688 = vunpack.c.l.b16 %v640
        %v689 = vpack.c.b16 %v674, %v673
        %v690 = vpack.c.b16 %v676, %v675
        %v691 = vpack.c.b16 %v678, %v677
        %v692 = vpack.c.b16 %v680, %v679
        %v693 = vpack.c.b16 %v682, %v681
        %v694 = vpack.c.b16 %v684, %v683
        %v695 = vpack.c.b16 %v686, %v685
        %v696 = vpack.c.b16 %v688, %v687
        %v721 = vunpack.c.l.b16 %v641
        %v722 = vunpack.c.l.b16 %v642
        %v723 = vunpack.c.l.b16 %v643
        %v724 = vunpack.c.l.b16 %v644
        %v725 = vunpack.c.l.b16 %v645
        %v726 = vunpack.c.l.b16 %v646
        %v727 = vunpack.c.l.b16 %v647
        %v728 = vunpack.c.l.b16 %v648
        %v729 = vunpack.c.l.b16 %v649
        %v730 = vunpack.c.l.b16 %v650
        %v731 = vunpack.c.l.b16 %v651
        %v732 = vunpack.c.l.b16 %v652
        %v733 = vunpack.c.l.b16 %v653
        %v734 = vunpack.c.l.b16 %v654
        %v735 = vunpack.c.l.b16 %v655
        %v736 = vunpack.c.l.b16 %v656
        %v737 = vpack.c.b16 %v722, %v721
        %v738 = vpack.c.b16 %v724, %v723
        %v739 = vpack.c.b16 %v726, %v725
        %v740 = vpack.c.b16 %v728, %v727
        %v741 = vpack.c.b16 %v730, %v729
        %v742 = vpack.c.b16 %v732, %v731
        %v743 = vpack.c.b16 %v734, %v733
        %v744 = vpack.c.b16 %v736, %v735
        %753 = vmatprep.subr.bf16.mxu0 0
        %754 = vmatpush1.bf16.msra.mxu0 %v744
        %755 = vmatprep.subr.bf16.mxu0 0
        %756 = vmatpush1.bf16.msra.mxu0 %v743
        %757 = vmatprep.subr.bf16.mxu0 0
        %758 = vmatpush1.bf16.msra.mxu0 %v742
        %759 = vmatprep.subr.bf16.mxu0 0
        %760 = vmatpush1.bf16.msra.mxu0 %v741
        %761 = vmatprep.subr.bf16.mxu0 0
        %762 = vmatpush1.bf16.msra.mxu0 %v740
        %763 = vmatprep.subr.bf16.mxu0 0
        %764 = vmatpush1.bf16.msra.mxu0 %v739
        %765 = vmatprep.subr.bf16.mxu0 0
        %766 = vmatpush1.bf16.msra.mxu0 %v738
        %767 = vmatprep.subr.bf16.mxu0 0
        %768 = vmatpush1.bf16.msra.mxu0 %v737
        %769 = vmatprep.subr.bf16.mxu0 0
        %770 = vmatpush2.bf16.msra.mxu0 0
        %771 = vmatprep.subr.bf16.mxu0 0
        %772 = vmatpush2.bf16.msra.mxu0 0
        %773 = vmatprep.subr.bf16.mxu0 0
        %774 = vmatpush2.bf16.msra.mxu0 0
        %775 = vmatprep.subr.bf16.mxu0 0
        %776 = vmatpush2.bf16.msra.mxu0 0
        %777 = vmatprep.subr.bf16.mxu0 0
        %778 = vmatpush2.bf16.msra.mxu0 0
        %779 = vmatprep.subr.bf16.mxu0 0
        %780 = vmatpush2.bf16.msra.mxu0 0
        %781 = vmatprep.subr.bf16.mxu0 0
        %782 = vmatpush2.bf16.msra.mxu0 0
        %783 = vmatprep.subr.bf16.mxu0 0
        %784 = vmatpush2.bf16.msra.mxu0 0
        %785 = vmatprep.mubr.bf16.mxu0 0
        %786 = vmatmul.mubr.bf16.gmra.mxu0 %v689
        %v787 = vpop.f32.mrf.mxu0
        %v788 = vadd.f32 0.0, %v787
        %v789 = vpop.f32.mrf.mxu0
        %v790 = vpop.f32.mrf.mxu0
        %v791 = vadd.f32 0.0, %v790
        %v792 = vpop.f32.mrf.mxu0
        %793 = vmatprep.mubr.bf16.mxu0 0
        %794 = vmatmul.mubr.bf16.gmra.mxu0 %v690
        %v795 = vpop.f32.mrf.mxu0
        %v796 = vadd.f32 0.0, %v795
        %v797 = vpop.f32.mrf.mxu0
        %v798 = vpop.f32.mrf.mxu0
        %v799 = vadd.f32 0.0, %v798
        %v800 = vpop.f32.mrf.mxu0
        %801 = vmatprep.mubr.bf16.mxu0 0
        %802 = vmatmul.mubr.bf16.gmra.mxu0 %v691
        %v803 = vpop.f32.mrf.mxu0
        %v804 = vadd.f32 0.0, %v803
        %v805 = vpop.f32.mrf.mxu0
        %v806 = vpop.f32.mrf.mxu0
        %v807 = vadd.f32 0.0, %v806
        %v808 = vpop.f32.mrf.mxu0
        %809 = vmatprep.mubr.bf16.mxu0 0
        %810 = vmatmul.mubr.bf16.gmra.mxu0 %v692
        %v811 = vpop.f32.mrf.mxu0
        %v812 = vadd.f32 0.0, %v811
        %v813 = vpop.f32.mrf.mxu0
        %v814 = vpop.f32.mrf.mxu0
        %v815 = vadd.f32 0.0, %v814
        %v816 = vpop.f32.mrf.mxu0
        %817 = vmatprep.mubr.bf16.mxu0 0
        %818 = vmatmul.mubr.bf16.gmra.mxu0 %v693
        %v819 = vpop.f32.mrf.mxu0
        %v820 = vadd.f32 0.0, %v819
        %v821 = vpop.f32.mrf.mxu0
        %v822 = vpop.f32.mrf.mxu0
        %v823 = vadd.f32 0.0, %v822
        %v824 = vpop.f32.mrf.mxu0
        %825 = vmatprep.mubr.bf16.mxu0 0
        %826 = vmatmul.mubr.bf16.gmra.mxu0 %v694
        %v827 = vpop.f32.mrf.mxu0
        %v828 = vadd.f32 0.0, %v827
        %v829 = vpop.f32.mrf.mxu0
        %v830 = vpop.f32.mrf.mxu0
        %v831 = vadd.f32 0.0, %v830
        %v832 = vpop.f32.mrf.mxu0
        %833 = vmatprep.mubr.bf16.mxu0 0
        %834 = vmatmul.mubr.bf16.gmra.mxu0 %v695
        %v835 = vpop.f32.mrf.mxu0
        %v836 = vadd.f32 0.0, %v835
        %v837 = vpop.f32.mrf.mxu0
        %v838 = vpop.f32.mrf.mxu0
        %v839 = vadd.f32 0.0, %v838
        %v840 = vpop.f32.mrf.mxu0
        %841 = vmatprep.mubr.bf16.mxu0 0
        %842 = vmatmul.mubr.bf16.gmra.mxu0 %v696
        %v843 = vpop.f32.mrf.mxu0
        %v844 = vadd.f32 0.0, %v843
        %v845 = vpop.f32.mrf.mxu0
        %v846 = vpop.f32.mrf.mxu0
        %v847 = vadd.f32 0.0, %v846
        %v848 = vpop.f32.mrf.mxu0
        %849 = vdwg.mxu0
        %v850 = vxor.u32 %v788, 2147483648
        %v851 = vxor.u32 %v791, 2147483648
        %v852 = vxor.u32 %v796, 2147483648
        %v853 = vxor.u32 %v799, 2147483648
        %v854 = vxor.u32 %v804, 2147483648
        %v855 = vxor.u32 %v807, 2147483648
        %v856 = vxor.u32 %v812, 2147483648
        %v857 = vxor.u32 %v815, 2147483648
        %v858 = vxor.u32 %v820, 2147483648
        %v859 = vxor.u32 %v823, 2147483648
        %v860 = vxor.u32 %v828, 2147483648
        %v861 = vxor.u32 %v831, 2147483648
        %v862 = vxor.u32 %v836, 2147483648
        %v863 = vxor.u32 %v839, 2147483648
        %v864 = vxor.u32 %v844, 2147483648
        %v865 = vxor.u32 %v847, 2147483648
        %v866 = vmul.f32 %v850, 1.442695
        %v867 = vpow.pop %v866
        %v868 = vmul.f32 %v851, 1.442695
        %v869 = vpow.pop %v868
        %v870 = vmul.f32 %v852, 1.442695
        %v871 = vpow.pop %v870
        %v872 = vmul.f32 %v853, 1.442695
        %v873 = vpow.pop %v872
        %v874 = vmul.f32 %v854, 1.442695
        %v875 = vpow.pop %v874
        %v876 = vmul.f32 %v855, 1.442695
        %v877 = vpow.pop %v876
        %v878 = vmul.f32 %v856, 1.442695
        %v879 = vpow.pop %v878
        %v880 = vmul.f32 %v857, 1.442695
        %v881 = vpow.pop %v880
        %v882 = vmul.f32 %v858, 1.442695
        %v883 = vpow.pop %v882
        %v884 = vmul.f32 %v859, 1.442695
        %v885 = vpow.pop %v884
        %v886 = vmul.f32 %v860, 1.442695
        %v887 = vpow.pop %v886
        %v888 = vmul.f32 %v861, 1.442695
        %v889 = vpow.pop %v888
        %v890 = vmul.f32 %v862, 1.442695
        %v891 = vpow.pop %v890
        %v892 = vmul.f32 %v863, 1.442695
        %v893 = vpow.pop %v892
        %v894 = vmul.f32 %v864, 1.442695
        %v895 = vpow.pop %v894
        %v896 = vmul.f32 %v865, 1.442695
        %v897 = vpow.pop %v896
        %v898 = vadd.f32 %v867, 1.0
        %v899 = vadd.f32 %v869, 1.0
        %v900 = vadd.f32 %v871, 1.0
        %v901 = vadd.f32 %v873, 1.0
        %v902 = vadd.f32 %v875, 1.0
        %v903 = vadd.f32 %v877, 1.0
        %v904 = vadd.f32 %v879, 1.0
        %v905 = vadd.f32 %v881, 1.0
        %v906 = vadd.f32 %v883, 1.0
        %v907 = vadd.f32 %v885, 1.0
        %v908 = vadd.f32 %v887, 1.0
        %v909 = vadd.f32 %v889, 1.0
        %v910 = vadd.f32 %v891, 1.0
        %v911 = vadd.f32 %v893, 1.0
        %v912 = vadd.f32 %v895, 1.0
        %v913 = vadd.f32 %v897, 1.0
        %v914 = vrcp.pop %v898
        %v915 = vmul.f32 1.0, %v914
        %v916 = vrcp.pop %v899
        %v917 = vmul.f32 1.0, %v916
        %v918 = vrcp.pop %v900
        %v919 = vmul.f32 1.0, %v918
        %v920 = vrcp.pop %v901
        %v921 = vmul.f32 1.0, %v920
        %v922 = vrcp.pop %v902
        %v923 = vmul.f32 1.0, %v922
        %v924 = vrcp.pop %v903
        %v925 = vmul.f32 1.0, %v924
        %v926 = vrcp.pop %v904
        %v927 = vmul.f32 1.0, %v926
        %v928 = vrcp.pop %v905
        %v929 = vmul.f32 1.0, %v928
        %v930 = vrcp.pop %v906
        %v931 = vmul.f32 1.0, %v930
        %v932 = vrcp.pop %v907
        %v933 = vmul.f32 1.0, %v932
        %v934 = vrcp.pop %v908
        %v935 = vmul.f32 1.0, %v934
        %v936 = vrcp.pop %v909
        %v937 = vmul.f32 1.0, %v936
        %v938 = vrcp.pop %v910
        %v939 = vmul.f32 1.0, %v938
        %v940 = vrcp.pop %v911
        %v941 = vmul.f32 1.0, %v940
        %v942 = vrcp.pop %v912
        %v943 = vmul.f32 1.0, %v942
        %v944 = vrcp.pop %v913
        %v945 = vmul.f32 1.0, %v944
        %v946 = vmul.f32 %v788, %v915
        %v947 = vmul.f32 %v791, %v917
        %v948 = vmul.f32 %v796, %v919
        %v949 = vmul.f32 %v799, %v921
        %v950 = vmul.f32 %v804, %v923
        %v951 = vmul.f32 %v807, %v925
        %v952 = vmul.f32 %v812, %v927
        %v953 = vmul.f32 %v815, %v929
        %v954 = vmul.f32 %v820, %v931
        %v955 = vmul.f32 %v823, %v933
        %v956 = vmul.f32 %v828, %v935
        %v957 = vmul.f32 %v831, %v937
        %v958 = vmul.f32 %v836, %v939
        %v959 = vmul.f32 %v839, %v941
        %v960 = vmul.f32 %v844, %v943
        %v961 = vmul.f32 %v847, %v945
        %v962 = vpack.c.bf16 %v947, %v946
        %v963 = vpack.c.bf16 %v949, %v948
        %v964 = vpack.c.bf16 %v951, %v950
        %v965 = vpack.c.bf16 %v953, %v952
        %v966 = vpack.c.bf16 %v955, %v954
        %v967 = vpack.c.bf16 %v957, %v956
        %v968 = vpack.c.bf16 %v959, %v958
        %v969 = vpack.c.bf16 %v961, %v960
        %v970 = vld [vmem:[#allocation8] sm:$0xf]
        %v971 = vld [vmem:[#allocation8 + $0x4] sm:$0xf]
        %v972 = vld [vmem:[#allocation8 + $0x8] sm:$0xf]
        %v973 = vld [vmem:[#allocation8 + $0xc] sm:$0xf]
        %v974 = vld [vmem:[#allocation8 + $0x10] sm:$0xf]
        %v975 = vld [vmem:[#allocation8 + $0x14] sm:$0xf]
        %v976 = vld [vmem:[#allocation8 + $0x18] sm:$0xf]
        %v977 = vld [vmem:[#allocation8 + $0x1c] sm:$0xf]
        %v978 = vld [vmem:[#allocation8 + $0x20] sm:$0xf]
        %v979 = vld [vmem:[#allocation8 + $0x24] sm:$0xf]
        %v980 = vld [vmem:[#allocation8 + $0x28] sm:$0xf]
        %v981 = vld [vmem:[#allocation8 + $0x2c] sm:$0xf]
        %v982 = vld [vmem:[#allocation8 + $0x30] sm:$0xf]
        %v983 = vld [vmem:[#allocation8 + $0x34] sm:$0xf]
        %v984 = vld [vmem:[#allocation8 + $0x38] sm:$0xf]
        %v985 = vld [vmem:[#allocation8 + $0x3c] sm:$0xf]
        %v1002 = vunpack.c.l.b16 %v970
        %v1003 = vunpack.c.l.b16 %v971
        %v1004 = vunpack.c.l.b16 %v972
        %v1005 = vunpack.c.l.b16 %v973
        %v1006 = vunpack.c.l.b16 %v974
        %v1007 = vunpack.c.l.b16 %v975
        %v1008 = vunpack.c.l.b16 %v976
        %v1009 = vunpack.c.l.b16 %v977
        %v1010 = vunpack.c.l.b16 %v978
        %v1011 = vunpack.c.l.b16 %v979
        %v1012 = vunpack.c.l.b16 %v980
        %v1013 = vunpack.c.l.b16 %v981
        %v1014 = vunpack.c.l.b16 %v982
        %v1015 = vunpack.c.l.b16 %v983
        %v1016 = vunpack.c.l.b16 %v984
        %v1017 = vunpack.c.l.b16 %v985
        %v1018 = vpack.c.b16 %v1003, %v1002
        %v1019 = vpack.c.b16 %v1005, %v1004
        %v1020 = vpack.c.b16 %v1007, %v1006
        %v1021 = vpack.c.b16 %v1009, %v1008
        %v1022 = vpack.c.b16 %v1011, %v1010
        %v1023 = vpack.c.b16 %v1013, %v1012
        %v1024 = vpack.c.b16 %v1015, %v1014
        %v1025 = vpack.c.b16 %v1017, %v1016
        %1034 = vmatprep.subr.bf16.mxu0 0
        %1035 = vmatpush1.bf16.msra.mxu0 %v1025
        %1036 = vmatprep.subr.bf16.mxu0 0
        %1037 = vmatpush1.bf16.msra.mxu0 %v1024
        %1038 = vmatprep.subr.bf16.mxu0 0
        %1039 = vmatpush1.bf16.msra.mxu0 %v1023
        %1040 = vmatprep.subr.bf16.mxu0 0
        %1041 = vmatpush1.bf16.msra.mxu0 %v1022
        %1042 = vmatprep.subr.bf16.mxu0 0
        %1043 = vmatpush1.bf16.msra.mxu0 %v1021
        %1044 = vmatprep.subr.bf16.mxu0 0
        %1045 = vmatpush1.bf16.msra.mxu0 %v1020
        %1046 = vmatprep.subr.bf16.mxu0 0
        %1047 = vmatpush1.bf16.msra.mxu0 %v1019
        %1048 = vmatprep.subr.bf16.mxu0 0
        %1049 = vmatpush1.bf16.msra.mxu0 %v1018
        %1050 = vmatprep.subr.bf16.mxu0 0
        %1051 = vmatpush2.bf16.msra.mxu0 0
        %1052 = vmatprep.subr.bf16.mxu0 0
        %1053 = vmatpush2.bf16.msra.mxu0 0
        %1054 = vmatprep.subr.bf16.mxu0 0
        %1055 = vmatpush2.bf16.msra.mxu0 0
        %1056 = vmatprep.subr.bf16.mxu0 0
        %1057 = vmatpush2.bf16.msra.mxu0 0
        %1058 = vmatprep.subr.bf16.mxu0 0
        %1059 = vmatpush2.bf16.msra.mxu0 0
        %1060 = vmatprep.subr.bf16.mxu0 0
        %1061 = vmatpush2.bf16.msra.mxu0 0
        %1062 = vmatprep.subr.bf16.mxu0 0
        %1063 = vmatpush2.bf16.msra.mxu0 0
        %1064 = vmatprep.subr.bf16.mxu0 0
        %1065 = vmatpush2.bf16.msra.mxu0 0
        %1066 = vmatprep.mubr.bf16.mxu0 0
        %1067 = vmatmul.mubr.bf16.gmra.mxu0 %v962
        %v1068 = vpop.f32.mrf.mxu0
        %v1069 = vadd.f32 0.0, %v1068
        %v1070 = vpop.f32.mrf.mxu0
        %v1071 = vpop.f32.mrf.mxu0
        %v1072 = vadd.f32 0.0, %v1071
        %v1073 = vpop.f32.mrf.mxu0
        %1074 = vmatprep.mubr.bf16.mxu0 0
        %1075 = vmatmul.mubr.bf16.gmra.mxu0 %v963
        %v1076 = vpop.f32.mrf.mxu0
        %v1077 = vadd.f32 0.0, %v1076
        %v1078 = vpop.f32.mrf.mxu0
        %v1079 = vpop.f32.mrf.mxu0
        %v1080 = vadd.f32 0.0, %v1079
        %v1081 = vpop.f32.mrf.mxu0
        %1082 = vmatprep.mubr.bf16.mxu0 0
        %1083 = vmatmul.mubr.bf16.gmra.mxu0 %v964
        %v1084 = vpop.f32.mrf.mxu0
        %v1085 = vadd.f32 0.0, %v1084
        %v1086 = vpop.f32.mrf.mxu0
        %v1087 = vpop.f32.mrf.mxu0
        %v1088 = vadd.f32 0.0, %v1087
        %v1089 = vpop.f32.mrf.mxu0
        %1090 = vmatprep.mubr.bf16.mxu0 0
        %1091 = vmatmul.mubr.bf16.gmra.mxu0 %v965
        %v1092 = vpop.f32.mrf.mxu0
        %v1093 = vadd.f32 0.0, %v1092
        %v1094 = vpop.f32.mrf.mxu0
        %v1095 = vpop.f32.mrf.mxu0
        %v1096 = vadd.f32 0.0, %v1095
        %v1097 = vpop.f32.mrf.mxu0
        %1098 = vmatprep.mubr.bf16.mxu0 0
        %1099 = vmatmul.mubr.bf16.gmra.mxu0 %v966
        %v1100 = vpop.f32.mrf.mxu0
        %v1101 = vadd.f32 0.0, %v1100
        %v1102 = vpop.f32.mrf.mxu0
        %v1103 = vpop.f32.mrf.mxu0
        %v1104 = vadd.f32 0.0, %v1103
        %v1105 = vpop.f32.mrf.mxu0
        %1106 = vmatprep.mubr.bf16.mxu0 0
        %1107 = vmatmul.mubr.bf16.gmra.mxu0 %v967
        %v1108 = vpop.f32.mrf.mxu0
        %v1109 = vadd.f32 0.0, %v1108
        %v1110 = vpop.f32.mrf.mxu0
        %v1111 = vpop.f32.mrf.mxu0
        %v1112 = vadd.f32 0.0, %v1111
        %v1113 = vpop.f32.mrf.mxu0
        %1114 = vmatprep.mubr.bf16.mxu0 0
        %1115 = vmatmul.mubr.bf16.gmra.mxu0 %v968
        %v1116 = vpop.f32.mrf.mxu0
        %v1117 = vadd.f32 0.0, %v1116
        %v1118 = vpop.f32.mrf.mxu0
        %v1119 = vpop.f32.mrf.mxu0
        %v1120 = vadd.f32 0.0, %v1119
        %v1121 = vpop.f32.mrf.mxu0
        %1122 = vmatprep.mubr.bf16.mxu0 0
        %1123 = vmatmul.mubr.bf16.gmra.mxu0 %v969
        %v1124 = vpop.f32.mrf.mxu0
        %v1125 = vadd.f32 0.0, %v1124
        %v1126 = vpop.f32.mrf.mxu0
        %v1127 = vpop.f32.mrf.mxu0
        %v1128 = vadd.f32 0.0, %v1127
        %v1129 = vpop.f32.mrf.mxu0
        %1130 = vdwg.mxu0
        %v1131 = vxor.u32 %v1069, 2147483648
        %v1132 = vxor.u32 %v1072, 2147483648
        %v1133 = vxor.u32 %v1077, 2147483648
        %v1134 = vxor.u32 %v1080, 2147483648
        %v1135 = vxor.u32 %v1085, 2147483648
        %v1136 = vxor.u32 %v1088, 2147483648
        %v1137 = vxor.u32 %v1093, 2147483648
        %v1138 = vxor.u32 %v1096, 2147483648
        %v1139 = vxor.u32 %v1101, 2147483648
        %v1140 = vxor.u32 %v1104, 2147483648
        %v1141 = vxor.u32 %v1109, 2147483648
        %v1142 = vxor.u32 %v1112, 2147483648
        %v1143 = vxor.u32 %v1117, 2147483648
        %v1144 = vxor.u32 %v1120, 2147483648
        %v1145 = vxor.u32 %v1125, 2147483648
        %v1146 = vxor.u32 %v1128, 2147483648
        %v1147 = vmul.f32 %v1131, 1.442695
        %v1148 = vpow.pop %v1147
        %v1149 = vmul.f32 %v1132, 1.442695
        %v1150 = vpow.pop %v1149
        %v1151 = vmul.f32 %v1133, 1.442695
        %v1152 = vpow.pop %v1151
        %v1153 = vmul.f32 %v1134, 1.442695
        %v1154 = vpow.pop %v1153
        %v1155 = vmul.f32 %v1135, 1.442695
        %v1156 = vpow.pop %v1155
        %v1157 = vmul.f32 %v1136, 1.442695
        %v1158 = vpow.pop %v1157
        %v1159 = vmul.f32 %v1137, 1.442695
        %v1160 = vpow.pop %v1159
        %v1161 = vmul.f32 %v1138, 1.442695
        %v1162 = vpow.pop %v1161
        %v1163 = vmul.f32 %v1139, 1.442695
        %v1164 = vpow.pop %v1163
        %v1165 = vmul.f32 %v1140, 1.442695
        %v1166 = vpow.pop %v1165
        %v1167 = vmul.f32 %v1141, 1.442695
        %v1168 = vpow.pop %v1167
        %v1169 = vmul.f32 %v1142, 1.442695
        %v1170 = vpow.pop %v1169
        %v1171 = vmul.f32 %v1143, 1.442695
        %v1172 = vpow.pop %v1171
        %v1173 = vmul.f32 %v1144, 1.442695
        %v1174 = vpow.pop %v1173
        %v1175 = vmul.f32 %v1145, 1.442695
        %v1176 = vpow.pop %v1175
        %v1177 = vmul.f32 %v1146, 1.442695
        %v1178 = vpow.pop %v1177
        %v1179 = vadd.f32 %v1148, 1.0
        %v1180 = vadd.f32 %v1150, 1.0
        %v1181 = vadd.f32 %v1152, 1.0
        %v1182 = vadd.f32 %v1154, 1.0
        %v1183 = vadd.f32 %v1156, 1.0
        %v1184 = vadd.f32 %v1158, 1.0
        %v1185 = vadd.f32 %v1160, 1.0
        %v1186 = vadd.f32 %v1162, 1.0
        %v1187 = vadd.f32 %v1164, 1.0
        %v1188 = vadd.f32 %v1166, 1.0
        %v1189 = vadd.f32 %v1168, 1.0
        %v1190 = vadd.f32 %v1170, 1.0
        %v1191 = vadd.f32 %v1172, 1.0
        %v1192 = vadd.f32 %v1174, 1.0
        %v1193 = vadd.f32 %v1176, 1.0
        %v1194 = vadd.f32 %v1178, 1.0
        %v1195 = vrcp.pop %v1179
        %v1196 = vmul.f32 1.0, %v1195
        %v1197 = vrcp.pop %v1180
        %v1198 = vmul.f32 1.0, %v1197
        %v1199 = vrcp.pop %v1181
        %v1200 = vmul.f32 1.0, %v1199
        %v1201 = vrcp.pop %v1182
        %v1202 = vmul.f32 1.0, %v1201
        %v1203 = vrcp.pop %v1183
        %v1204 = vmul.f32 1.0, %v1203
        %v1205 = vrcp.pop %v1184
        %v1206 = vmul.f32 1.0, %v1205
        %v1207 = vrcp.pop %v1185
        %v1208 = vmul.f32 1.0, %v1207
        %v1209 = vrcp.pop %v1186
        %v1210 = vmul.f32 1.0, %v1209
        %v1211 = vrcp.pop %v1187
        %v1212 = vmul.f32 1.0, %v1211
        %v1213 = vrcp.pop %v1188
        %v1214 = vmul.f32 1.0, %v1213
        %v1215 = vrcp.pop %v1189
        %v1216 = vmul.f32 1.0, %v1215
        %v1217 = vrcp.pop %v1190
        %v1218 = vmul.f32 1.0, %v1217
        %v1219 = vrcp.pop %v1191
        %v1220 = vmul.f32 1.0, %v1219
        %v1221 = vrcp.pop %v1192
        %v1222 = vmul.f32 1.0, %v1221
        %v1223 = vrcp.pop %v1193
        %v1224 = vmul.f32 1.0, %v1223
        %v1225 = vrcp.pop %v1194
        %v1226 = vmul.f32 1.0, %v1225
        %v1227 = vmul.f32 %v1069, %v1196
        %v1228 = vmul.f32 %v1072, %v1198
        %v1229 = vmul.f32 %v1077, %v1200
        %v1230 = vmul.f32 %v1080, %v1202
        %v1231 = vmul.f32 %v1085, %v1204
        %v1232 = vmul.f32 %v1088, %v1206
        %v1233 = vmul.f32 %v1093, %v1208
        %v1234 = vmul.f32 %v1096, %v1210
        %v1235 = vmul.f32 %v1101, %v1212
        %v1236 = vmul.f32 %v1104, %v1214
        %v1237 = vmul.f32 %v1109, %v1216
        %v1238 = vmul.f32 %v1112, %v1218
        %v1239 = vmul.f32 %v1117, %v1220
        %v1240 = vmul.f32 %v1120, %v1222
        %v1241 = vmul.f32 %v1125, %v1224
        %v1242 = vmul.f32 %v1128, %v1226
        %v1243 = vpack.c.bf16 %v1228, %v1227
        %v1244 = vpack.c.bf16 %v1230, %v1229
        %v1245 = vpack.c.bf16 %v1232, %v1231
        %v1246 = vpack.c.bf16 %v1234, %v1233
        %v1247 = vpack.c.bf16 %v1236, %v1235
        %v1248 = vpack.c.bf16 %v1238, %v1237
        %v1249 = vpack.c.bf16 %v1240, %v1239
        %v1250 = vpack.c.bf16 %v1242, %v1241
        %v1251 = vld [vmem:[#allocation10] sm:$0xf]
        %v1252 = vld [vmem:[#allocation10 + $0x4] sm:$0xf]
        %v1253 = vld [vmem:[#allocation10 + $0x8] sm:$0xf]
        %v1254 = vld [vmem:[#allocation10 + $0xc] sm:$0xf]
        %v1255 = vld [vmem:[#allocation10 + $0x10] sm:$0xf]
        %v1256 = vld [vmem:[#allocation10 + $0x14] sm:$0xf]
        %v1257 = vld [vmem:[#allocation10 + $0x18] sm:$0xf]
        %v1258 = vld [vmem:[#allocation10 + $0x1c] sm:$0xf]
        %v1259 = vld [vmem:[#allocation10 + $0x20] sm:$0xf]
        %v1260 = vld [vmem:[#allocation10 + $0x24] sm:$0xf]
        %v1261 = vld [vmem:[#allocation10 + $0x28] sm:$0xf]
        %v1262 = vld [vmem:[#allocation10 + $0x2c] sm:$0xf]
        %v1263 = vld [vmem:[#allocation10 + $0x30] sm:$0xf]
        %v1264 = vld [vmem:[#allocation10 + $0x34] sm:$0xf]
        %v1265 = vld [vmem:[#allocation10 + $0x38] sm:$0xf]
        %v1266 = vld [vmem:[#allocation10 + $0x3c] sm:$0xf]
        %v1283 = vunpack.c.l.b16 %v1251
        %v1284 = vunpack.c.l.b16 %v1252
        %v1285 = vunpack.c.l.b16 %v1253
        %v1286 = vunpack.c.l.b16 %v1254
        %v1287 = vunpack.c.l.b16 %v1255
        %v1288 = vunpack.c.l.b16 %v1256
        %v1289 = vunpack.c.l.b16 %v1257
        %v1290 = vunpack.c.l.b16 %v1258
        %v1291 = vunpack.c.l.b16 %v1259
        %v1292 = vunpack.c.l.b16 %v1260
        %v1293 = vunpack.c.l.b16 %v1261
        %v1294 = vunpack.c.l.b16 %v1262
        %v1295 = vunpack.c.l.b16 %v1263
        %v1296 = vunpack.c.l.b16 %v1264
        %v1297 = vunpack.c.l.b16 %v1265
        %v1298 = vunpack.c.l.b16 %v1266
        %v1299 = vpack.c.b16 %v1284, %v1283
        %v1300 = vpack.c.b16 %v1286, %v1285
        %v1301 = vpack.c.b16 %v1288, %v1287
        %v1302 = vpack.c.b16 %v1290, %v1289
        %v1303 = vpack.c.b16 %v1292, %v1291
        %v1304 = vpack.c.b16 %v1294, %v1293
        %v1305 = vpack.c.b16 %v1296, %v1295
        %v1306 = vpack.c.b16 %v1298, %v1297
        %1315 = vmatprep.subr.bf16.mxu0 0
        %1316 = vmatpush1.bf16.msra.mxu0 %v1306
        %1317 = vmatprep.subr.bf16.mxu0 0
        %1318 = vmatpush1.bf16.msra.mxu0 %v1305
        %1319 = vmatprep.subr.bf16.mxu0 0
        %1320 = vmatpush1.bf16.msra.mxu0 %v1304
        %1321 = vmatprep.subr.bf16.mxu0 0
        %1322 = vmatpush1.bf16.msra.mxu0 %v1303
        %1323 = vmatprep.subr.bf16.mxu0 0
        %1324 = vmatpush1.bf16.msra.mxu0 %v1302
        %1325 = vmatprep.subr.bf16.mxu0 0
        %1326 = vmatpush1.bf16.msra.mxu0 %v1301
        %1327 = vmatprep.subr.bf16.mxu0 0
        %1328 = vmatpush1.bf16.msra.mxu0 %v1300
        %1329 = vmatprep.subr.bf16.mxu0 0
        %1330 = vmatpush1.bf16.msra.mxu0 %v1299
        %1331 = vmatprep.subr.bf16.mxu0 0
        %1332 = vmatpush2.bf16.msra.mxu0 0
        %1333 = vmatprep.subr.bf16.mxu0 0
        %1334 = vmatpush2.bf16.msra.mxu0 0
        %1335 = vmatprep.subr.bf16.mxu0 0
        %1336 = vmatpush2.bf16.msra.mxu0 0
        %1337 = vmatprep.subr.bf16.mxu0 0
        %1338 = vmatpush2.bf16.msra.mxu0 0
        %1339 = vmatprep.subr.bf16.mxu0 0
        %1340 = vmatpush2.bf16.msra.mxu0 0
        %1341 = vmatprep.subr.bf16.mxu0 0
        %1342 = vmatpush2.bf16.msra.mxu0 0
        %1343 = vmatprep.subr.bf16.mxu0 0
        %1344 = vmatpush2.bf16.msra.mxu0 0
        %1345 = vmatprep.subr.bf16.mxu0 0
        %1346 = vmatpush2.bf16.msra.mxu0 0
        %1347 = vmatprep.mubr.bf16.mxu0 0
        %1348 = vmatmul.mubr.bf16.gmra.mxu0 %v1243
        %v1349 = vpop.f32.mrf.mxu0
        %v1350 = vadd.f32 0.0, %v1349
        %v1351 = vpop.f32.mrf.mxu0
        %v1352 = vpop.f32.mrf.mxu0
        %v1353 = vadd.f32 0.0, %v1352
        %v1354 = vpop.f32.mrf.mxu0
        %1355 = vmatprep.mubr.bf16.mxu0 0
        %1356 = vmatmul.mubr.bf16.gmra.mxu0 %v1244
        %v1357 = vpop.f32.mrf.mxu0
        %v1358 = vadd.f32 0.0, %v1357
        %v1359 = vpop.f32.mrf.mxu0
        %v1360 = vpop.f32.mrf.mxu0
        %v1361 = vadd.f32 0.0, %v1360
        %v1362 = vpop.f32.mrf.mxu0
        %1363 = vmatprep.mubr.bf16.mxu0 0
        %1364 = vmatmul.mubr.bf16.gmra.mxu0 %v1245
        %v1365 = vpop.f32.mrf.mxu0
        %v1366 = vadd.f32 0.0, %v1365
        %v1367 = vpop.f32.mrf.mxu0
        %v1368 = vpop.f32.mrf.mxu0
        %v1369 = vadd.f32 0.0, %v1368
        %v1370 = vpop.f32.mrf.mxu0
        %1371 = vmatprep.mubr.bf16.mxu0 0
        %1372 = vmatmul.mubr.bf16.gmra.mxu0 %v1246
        %v1373 = vpop.f32.mrf.mxu0
        %v1374 = vadd.f32 0.0, %v1373
        %v1375 = vpop.f32.mrf.mxu0
        %v1376 = vpop.f32.mrf.mxu0
        %v1377 = vadd.f32 0.0, %v1376
        %v1378 = vpop.f32.mrf.mxu0
        %1379 = vmatprep.mubr.bf16.mxu0 0
        %1380 = vmatmul.mubr.bf16.gmra.mxu0 %v1247
        %v1381 = vpop.f32.mrf.mxu0
        %v1382 = vadd.f32 0.0, %v1381
        %v1383 = vpop.f32.mrf.mxu0
        %v1384 = vpop.f32.mrf.mxu0
        %v1385 = vadd.f32 0.0, %v1384
        %v1386 = vpop.f32.mrf.mxu0
        %1387 = vmatprep.mubr.bf16.mxu0 0
        %1388 = vmatmul.mubr.bf16.gmra.mxu0 %v1248
        %v1389 = vpop.f32.mrf.mxu0
        %v1390 = vadd.f32 0.0, %v1389
        %v1391 = vpop.f32.mrf.mxu0
        %v1392 = vpop.f32.mrf.mxu0
        %v1393 = vadd.f32 0.0, %v1392
        %v1394 = vpop.f32.mrf.mxu0
        %1395 = vmatprep.mubr.bf16.mxu0 0
        %1396 = vmatmul.mubr.bf16.gmra.mxu0 %v1249
        %v1397 = vpop.f32.mrf.mxu0
        %v1398 = vadd.f32 0.0, %v1397
        %v1399 = vpop.f32.mrf.mxu0
        %v1400 = vpop.f32.mrf.mxu0
        %v1401 = vadd.f32 0.0, %v1400
        %v1402 = vpop.f32.mrf.mxu0
        %1403 = vmatprep.mubr.bf16.mxu0 0
        %1404 = vmatmul.mubr.bf16.gmra.mxu0 %v1250
        %v1405 = vpop.f32.mrf.mxu0
        %v1406 = vadd.f32 0.0, %v1405
        %v1407 = vpop.f32.mrf.mxu0
        %v1408 = vpop.f32.mrf.mxu0
        %v1409 = vadd.f32 0.0, %v1408
        %v1410 = vpop.f32.mrf.mxu0
        %1411 = vdwg.mxu0
        %v1412 = vlaneseq
        %v1413 = vand.u32 %v1412, 127
        %v1414 = vld [vmem:[%s601] sm:$0xff]
        %v1415 = vld [vmem:[%s601 + $0x8] sm:$0xff]
        %v1416 = vld [vmem:[%s601 + $0x10] sm:$0xff]
        %v1417 = vld [vmem:[%s601 + $0x18] sm:$0xff]
        %v1418 = vld [vmem:[%s601 + $0x20] sm:$0xff]
        %v1419 = vld [vmem:[%s601 + $0x28] sm:$0xff]
        %v1420 = vld [vmem:[%s601 + $0x30] sm:$0xff]
        %v1421 = vld [vmem:[%s601 + $0x38] sm:$0xff]
        %v1422 = vld [vmem:[%s601 + $0x40] sm:$0xff]
        %v1423 = vld [vmem:[%s601 + $0x48] sm:$0xff]
        %v1424 = vld [vmem:[%s601 + $0x50] sm:$0xff]
        %v1425 = vld [vmem:[%s601 + $0x58] sm:$0xff]
        %v1426 = vld [vmem:[%s601 + $0x60] sm:$0xff]
        %v1427 = vld [vmem:[%s601 + $0x68] sm:$0xff]
        %v1428 = vld [vmem:[%s601 + $0x70] sm:$0xff]
        %v1429 = vld [vmem:[%s601 + $0x78] sm:$0xff]
        %1430 = vset.pattern.permute.xlu0 0
        %1431 = vperm.xlu0 %1430, %v1414
        %v1432 = vpop.permute.xlu0 %1431
        %1433 = vset.pattern.permute.xlu0 0
        %1434 = vperm.xlu0 %1433, %v1415
        %v1435 = vpop.permute.xlu0 %1434
        %1436 = vset.pattern.permute.xlu0 0
        %1437 = vperm.xlu0 %1436, %v1416
        %v1438 = vpop.permute.xlu0 %1437
        %1439 = vset.pattern.permute.xlu0 0
        %1440 = vperm.xlu0 %1439, %v1417
        %v1441 = vpop.permute.xlu0 %1440
        %1442 = vset.pattern.permute.xlu0 0
        %1443 = vperm.xlu0 %1442, %v1418
        %v1444 = vpop.permute.xlu0 %1443
        %1445 = vset.pattern.permute.xlu0 0
        %1446 = vperm.xlu0 %1445, %v1419
        %v1447 = vpop.permute.xlu0 %1446
        %1448 = vset.pattern.permute.xlu0 0
        %1449 = vperm.xlu0 %1448, %v1420
        %v1450 = vpop.permute.xlu0 %1449
        %1451 = vset.pattern.permute.xlu0 0
        %1452 = vperm.xlu0 %1451, %v1421
        %v1453 = vpop.permute.xlu0 %1452
        %1454 = vset.pattern.permute.xlu0 0
        %1455 = vperm.xlu0 %1454, %v1422
        %v1456 = vpop.permute.xlu0 %1455
        %1457 = vset.pattern.permute.xlu0 0
        %1458 = vperm.xlu0 %1457, %v1423
        %v1459 = vpop.permute.xlu0 %1458
        %1460 = vset.pattern.permute.xlu0 0
        %1461 = vperm.xlu0 %1460, %v1424
        %v1462 = vpop.permute.xlu0 %1461
        %1463 = vset.pattern.permute.xlu0 0
        %1464 = vperm.xlu0 %1463, %v1425
        %v1465 = vpop.permute.xlu0 %1464
        %1466 = vset.pattern.permute.xlu0 0
        %1467 = vperm.xlu0 %1466, %v1426
        %v1468 = vpop.permute.xlu0 %1467
        %1469 = vset.pattern.permute.xlu0 0
        %1470 = vperm.xlu0 %1469, %v1427
        %v1471 = vpop.permute.xlu0 %1470
        %1472 = vset.pattern.permute.xlu0 0
        %1473 = vperm.xlu0 %1472, %v1428
        %v1474 = vpop.permute.xlu0 %1473
        %1475 = vset.pattern.permute.xlu0 0
        %1476 = vperm.xlu0 %1475, %v1429
        %v1477 = vpop.permute.xlu0 %1476
        %vm1478 = vcmp.eq.s32.totalorder %v1413, %v1432
        %vm1479 = vcmp.eq.s32.totalorder %v1413, %v1435
        %vm1480 = vcmp.eq.s32.totalorder %v1413, %v1438
        %vm1481 = vcmp.eq.s32.totalorder %v1413, %v1441
        %vm1482 = vcmp.eq.s32.totalorder %v1413, %v1444
        %vm1483 = vcmp.eq.s32.totalorder %v1413, %v1447
        %vm1484 = vcmp.eq.s32.totalorder %v1413, %v1450
        %vm1485 = vcmp.eq.s32.totalorder %v1413, %v1453
        %vm1486 = vcmp.eq.s32.totalorder %v1413, %v1456
        %vm1487 = vcmp.eq.s32.totalorder %v1413, %v1459
        %vm1488 = vcmp.eq.s32.totalorder %v1413, %v1462
        %vm1489 = vcmp.eq.s32.totalorder %v1413, %v1465
        %vm1490 = vcmp.eq.s32.totalorder %v1413, %v1468
        %vm1491 = vcmp.eq.s32.totalorder %v1413, %v1471
        %vm1492 = vcmp.eq.s32.totalorder %v1413, %v1474
        %vm1493 = vcmp.eq.s32.totalorder %v1413, %v1477
        %v1494 = vsel %vm1478, 1, 0
        %v1495 = vsel %vm1479, 1, 0
        %v1496 = vsel %vm1480, 1, 0
        %v1497 = vsel %vm1481, 1, 0
        %v1498 = vsel %vm1482, 1, 0
        %v1499 = vsel %vm1483, 1, 0
        %v1500 = vsel %vm1484, 1, 0
        %v1501 = vsel %vm1485, 1, 0
        %v1502 = vsel %vm1486, 1, 0
        %v1503 = vsel %vm1487, 1, 0
        %v1504 = vsel %vm1488, 1, 0
        %v1505 = vsel %vm1489, 1, 0
        %v1506 = vsel %vm1490, 1, 0
        %v1507 = vsel %vm1491, 1, 0
        %v1508 = vsel %vm1492, 1, 0
        %v1509 = vsel %vm1493, 1, 0
        %v1510 = vcvt.s32.f32 %v1494
        %v1511 = vcvt.s32.f32 %v1495
        %v1512 = vcvt.s32.f32 %v1496
        %v1513 = vcvt.s32.f32 %v1497
        %v1514 = vcvt.s32.f32 %v1498
        %v1515 = vcvt.s32.f32 %v1499
        %v1516 = vcvt.s32.f32 %v1500
        %v1517 = vcvt.s32.f32 %v1501
        %v1518 = vcvt.s32.f32 %v1502
        %v1519 = vcvt.s32.f32 %v1503
        %v1520 = vcvt.s32.f32 %v1504
        %v1521 = vcvt.s32.f32 %v1505
        %v1522 = vcvt.s32.f32 %v1506
        %v1523 = vcvt.s32.f32 %v1507
        %v1524 = vcvt.s32.f32 %v1508
        %v1525 = vcvt.s32.f32 %v1509
        %v1526 = vpack.c.bf16 %v1511, %v1510
        %v1527 = vpack.c.bf16 %v1513, %v1512
        %v1528 = vpack.c.bf16 %v1515, %v1514
        %v1529 = vpack.c.bf16 %v1517, %v1516
        %v1530 = vpack.c.bf16 %v1519, %v1518
        %v1531 = vpack.c.bf16 %v1521, %v1520
        %v1532 = vpack.c.bf16 %v1523, %v1522
        %v1533 = vpack.c.bf16 %v1525, %v1524
        %v1534 = vld [vmem:[#allocation2] sm:$0xf]
        %v1535 = vld [vmem:[#allocation2 + $0x4] sm:$0xf]
        %v1538 = vunpack.c.l.b16 %v1534
        %v1539 = vunpack.c.l.b16 %v1535
        %v1540 = vpack.c.b16 %v1539, %v1538
        %vm1542 = vcmask 130048
        %v1544 = vsel %vm1542, %v1526, 0
        %v1547 = vsel %vm1542, %v1527, 0
        %v1550 = vsel %vm1542, %v1528, 0
        %v1553 = vsel %vm1542, %v1529, 0
        %v1556 = vsel %vm1542, %v1530, 0
        %v1559 = vsel %vm1542, %v1531, 0
        %v1562 = vsel %vm1542, %v1532, 0
        %v1565 = vsel %vm1542, %v1533, 0
        %1567 = vmatprep.subr.bf16.mxu0 0
        %1568 = vmatpush1.bf16.msra.mxu0 0
        %1569 = vmatprep.subr.bf16.mxu0 0
        %1570 = vmatpush1.bf16.msra.mxu0 0
        %1571 = vmatprep.subr.bf16.mxu0 0
        %1572 = vmatpush1.bf16.msra.mxu0 0
        %1573 = vmatprep.subr.bf16.mxu0 0
        %1574 = vmatpush1.bf16.msra.mxu0 0
        %1575 = vmatprep.subr.bf16.mxu0 0
        %1576 = vmatpush1.bf16.msra.mxu0 0
        %1577 = vmatprep.subr.bf16.mxu0 0
        %1578 = vmatpush1.bf16.msra.mxu0 0
        %1579 = vmatprep.subr.bf16.mxu0 0
        %1580 = vmatpush1.bf16.msra.mxu0 0
        %1581 = vmatprep.subr.bf16.mxu0 0
        %1582 = vmatpush1.bf16.msra.mxu0 %v1540
        %1583 = vmatprep.subr.bf16.mxu0 0
        %1584 = vmatpush2.bf16.msra.mxu0 0
        %1585 = vmatprep.subr.bf16.mxu0 0
        %1586 = vmatpush2.bf16.msra.mxu0 0
        %1587 = vmatprep.subr.bf16.mxu0 0
        %1588 = vmatpush2.bf16.msra.mxu0 0
        %1589 = vmatprep.subr.bf16.mxu0 0
        %1590 = vmatpush2.bf16.msra.mxu0 0
        %1591 = vmatprep.subr.bf16.mxu0 0
        %1592 = vmatpush2.bf16.msra.mxu0 0
        %1593 = vmatprep.subr.bf16.mxu0 0
        %1594 = vmatpush2.bf16.msra.mxu0 0
        %1595 = vmatprep.subr.bf16.mxu0 0
        %1596 = vmatpush2.bf16.msra.mxu0 0
        %1597 = vmatprep.subr.bf16.mxu0 0
        %1598 = vmatpush2.bf16.msra.mxu0 0
        %1599 = vmatprep.mubr.bf16.mxu0 0
        %1600 = vmatmul.mubr.bf16.gmra.mxu0 %v1544
        %v1601 = vpop.f32.mrf.mxu0
        %v1602 = vadd.f32 0.0, %v1601
        %v1603 = vpop.f32.mrf.mxu0
        %v1604 = vpop.f32.mrf.mxu0
        %v1605 = vadd.f32 0.0, %v1604
        %v1606 = vpop.f32.mrf.mxu0
        %1607 = vmatprep.mubr.bf16.mxu0 0
        %1608 = vmatmul.mubr.bf16.gmra.mxu0 %v1547
        %v1609 = vpop.f32.mrf.mxu0
        %v1610 = vadd.f32 0.0, %v1609
        %v1611 = vpop.f32.mrf.mxu0
        %v1612 = vpop.f32.mrf.mxu0
        %v1613 = vadd.f32 0.0, %v1612
        %v1614 = vpop.f32.mrf.mxu0
        %1615 = vmatprep.mubr.bf16.mxu0 0
        %1616 = vmatmul.mubr.bf16.gmra.mxu0 %v1550
        %v1617 = vpop.f32.mrf.mxu0
        %v1618 = vadd.f32 0.0, %v1617
        %v1619 = vpop.f32.mrf.mxu0
        %v1620 = vpop.f32.mrf.mxu0
        %v1621 = vadd.f32 0.0, %v1620
        %v1622 = vpop.f32.mrf.mxu0
        %1623 = vmatprep.mubr.bf16.mxu0 0
        %1624 = vmatmul.mubr.bf16.gmra.mxu0 %v1553
        %v1625 = vpop.f32.mrf.mxu0
        %v1626 = vadd.f32 0.0, %v1625
        %v1627 = vpop.f32.mrf.mxu0
        %v1628 = vpop.f32.mrf.mxu0
        %v1629 = vadd.f32 0.0, %v1628
        %v1630 = vpop.f32.mrf.mxu0
        %1631 = vmatprep.mubr.bf16.mxu0 0
        %1632 = vmatmul.mubr.bf16.gmra.mxu0 %v1556
        %v1633 = vpop.f32.mrf.mxu0
        %v1634 = vadd.f32 0.0, %v1633
        %v1635 = vpop.f32.mrf.mxu0
        %v1636 = vpop.f32.mrf.mxu0
        %v1637 = vadd.f32 0.0, %v1636
        %v1638 = vpop.f32.mrf.mxu0
        %1639 = vmatprep.mubr.bf16.mxu0 0
        %1640 = vmatmul.mubr.bf16.gmra.mxu0 %v1559
        %v1641 = vpop.f32.mrf.mxu0
        %v1642 = vadd.f32 0.0, %v1641
        %v1643 = vpop.f32.mrf.mxu0
        %v1644 = vpop.f32.mrf.mxu0
        %v1645 = vadd.f32 0.0, %v1644
        %v1646 = vpop.f32.mrf.mxu0
        %1647 = vmatprep.mubr.bf16.mxu0 0
        %1648 = vmatmul.mubr.bf16.gmra.mxu0 %v1562
        %v1649 = vpop.f32.mrf.mxu0
        %v1650 = vadd.f32 0.0, %v1649
        %v1651 = vpop.f32.mrf.mxu0
        %v1652 = vpop.f32.mrf.mxu0
        %v1653 = vadd.f32 0.0, %v1652
        %v1654 = vpop.f32.mrf.mxu0
        %1655 = vmatprep.mubr.bf16.mxu0 0
        %1656 = vmatmul.mubr.bf16.gmra.mxu0 %v1565
        %v1657 = vpop.f32.mrf.mxu0
        %v1658 = vadd.f32 0.0, %v1657
        %v1659 = vpop.f32.mrf.mxu0
        %v1660 = vpop.f32.mrf.mxu0
        %v1661 = vadd.f32 0.0, %v1660
        %v1662 = vpop.f32.mrf.mxu0
        %1663 = vdwg.mxu0
        %v1664 = vpack.c.bf16 %v1605, %v1602
        %v1665 = vpack.c.bf16 %v1613, %v1610
        %v1666 = vpack.c.bf16 %v1621, %v1618
        %v1667 = vpack.c.bf16 %v1629, %v1626
        %v1668 = vpack.c.bf16 %v1637, %v1634
        %v1669 = vpack.c.bf16 %v1645, %v1642
        %v1670 = vpack.c.bf16 %v1653, %v1650
        %v1671 = vpack.c.bf16 %v1661, %v1658
        %v1672 = vld [vmem:[#allocation11] sm:$0xf]
        %v1673 = vld [vmem:[#allocation11 + $0x4] sm:$0xf]
        %v1674 = vld [vmem:[#allocation11 + $0x8] sm:$0xf]
        %v1675 = vld [vmem:[#allocation11 + $0xc] sm:$0xf]
        %v1676 = vld [vmem:[#allocation11 + $0x10] sm:$0xf]
        %v1677 = vld [vmem:[#allocation11 + $0x14] sm:$0xf]
        %v1678 = vld [vmem:[#allocation11 + $0x18] sm:$0xf]
        %v1679 = vld [vmem:[#allocation11 + $0x1c] sm:$0xf]
        %v1680 = vld [vmem:[#allocation11 + $0x20] sm:$0xf]
        %v1681 = vld [vmem:[#allocation11 + $0x24] sm:$0xf]
        %v1682 = vld [vmem:[#allocation11 + $0x28] sm:$0xf]
        %v1683 = vld [vmem:[#allocation11 + $0x2c] sm:$0xf]
        %v1684 = vld [vmem:[#allocation11 + $0x30] sm:$0xf]
        %v1685 = vld [vmem:[#allocation11 + $0x34] sm:$0xf]
        %v1686 = vld [vmem:[#allocation11 + $0x38] sm:$0xf]
        %v1687 = vld [vmem:[#allocation11 + $0x3c] sm:$0xf]
        %v1704 = vunpack.c.l.b16 %v1672
        %v1705 = vunpack.c.l.b16 %v1673
        %v1706 = vunpack.c.l.b16 %v1674
        %v1707 = vunpack.c.l.b16 %v1675
        %v1708 = vunpack.c.l.b16 %v1676
        %v1709 = vunpack.c.l.b16 %v1677
        %v1710 = vunpack.c.l.b16 %v1678
        %v1711 = vunpack.c.l.b16 %v1679
        %v1712 = vunpack.c.l.b16 %v1680
        %v1713 = vunpack.c.l.b16 %v1681
        %v1714 = vunpack.c.l.b16 %v1682
        %v1715 = vunpack.c.l.b16 %v1683
        %v1716 = vunpack.c.l.b16 %v1684
        %v1717 = vunpack.c.l.b16 %v1685
        %v1718 = vunpack.c.l.b16 %v1686
        %v1719 = vunpack.c.l.b16 %v1687
        %v1720 = vpack.c.b16 %v1705, %v1704
        %v1721 = vpack.c.b16 %v1707, %v1706
        %v1722 = vpack.c.b16 %v1709, %v1708
        %v1723 = vpack.c.b16 %v1711, %v1710
        %v1724 = vpack.c.b16 %v1713, %v1712
        %v1725 = vpack.c.b16 %v1715, %v1714
        %v1726 = vpack.c.b16 %v1717, %v1716
        %v1727 = vpack.c.b16 %v1719, %v1718
        %1736 = vmatprep.subr.bf16.mxu0 0
        %1737 = vmatpush1.bf16.msra.mxu0 %v1727
        %1738 = vmatprep.subr.bf16.mxu0 0
        %1739 = vmatpush1.bf16.msra.mxu0 %v1726
        %1740 = vmatprep.subr.bf16.mxu0 0
        %1741 = vmatpush1.bf16.msra.mxu0 %v1725
        %1742 = vmatprep.subr.bf16.mxu0 0
        %1743 = vmatpush1.bf16.msra.mxu0 %v1724
        %1744 = vmatprep.subr.bf16.mxu0 0
        %1745 = vmatpush1.bf16.msra.mxu0 %v1723
        %1746 = vmatprep.subr.bf16.mxu0 0
        %1747 = vmatpush1.bf16.msra.mxu0 %v1722
        %1748 = vmatprep.subr.bf16.mxu0 0
        %1749 = vmatpush1.bf16.msra.mxu0 %v1721
        %1750 = vmatprep.subr.bf16.mxu0 0
        %1751 = vmatpush1.bf16.msra.mxu0 %v1720
        %1752 = vmatprep.subr.bf16.mxu0 0
        %1753 = vmatpush2.bf16.msra.mxu0 0
        %1754 = vmatprep.subr.bf16.mxu0 0
        %1755 = vmatpush2.bf16.msra.mxu0 0
        %1756 = vmatprep.subr.bf16.mxu0 0
        %1757 = vmatpush2.bf16.msra.mxu0 0
        %1758 = vmatprep.subr.bf16.mxu0 0
        %1759 = vmatpush2.bf16.msra.mxu0 0
        %1760 = vmatprep.subr.bf16.mxu0 0
        %1761 = vmatpush2.bf16.msra.mxu0 0
        %1762 = vmatprep.subr.bf16.mxu0 0
        %1763 = vmatpush2.bf16.msra.mxu0 0
        %1764 = vmatprep.subr.bf16.mxu0 0
        %1765 = vmatpush2.bf16.msra.mxu0 0
        %1766 = vmatprep.subr.bf16.mxu0 0
        %1767 = vmatpush2.bf16.msra.mxu0 0
        %1768 = vmatprep.mubr.bf16.mxu0 0
        %1769 = vmatmul.mubr.bf16.gmra.mxu0 %v1664
        %v1770 = vpop.f32.mrf.mxu0
        %v1771 = vadd.f32 0.0, %v1770
        %v1772 = vpop.f32.mrf.mxu0
        %v1773 = vpop.f32.mrf.mxu0
        %v1774 = vadd.f32 0.0, %v1773
        %v1775 = vpop.f32.mrf.mxu0
        %1776 = vmatprep.mubr.bf16.mxu0 0
        %1777 = vmatmul.mubr.bf16.gmra.mxu0 %v1665
        %v1778 = vpop.f32.mrf.mxu0
        %v1779 = vadd.f32 0.0, %v1778
        %v1780 = vpop.f32.mrf.mxu0
        %v1781 = vpop.f32.mrf.mxu0
        %v1782 = vadd.f32 0.0, %v1781
        %v1783 = vpop.f32.mrf.mxu0
        %1784 = vmatprep.mubr.bf16.mxu0 0
        %1785 = vmatmul.mubr.bf16.gmra.mxu0 %v1666
        %v1786 = vpop.f32.mrf.mxu0
        %v1787 = vadd.f32 0.0, %v1786
        %v1788 = vpop.f32.mrf.mxu0
        %v1789 = vpop.f32.mrf.mxu0
        %v1790 = vadd.f32 0.0, %v1789
        %v1791 = vpop.f32.mrf.mxu0
        %1792 = vmatprep.mubr.bf16.mxu0 0
        %1793 = vmatmul.mubr.bf16.gmra.mxu0 %v1667
        %v1794 = vpop.f32.mrf.mxu0
        %v1795 = vadd.f32 0.0, %v1794
        %v1796 = vpop.f32.mrf.mxu0
        %v1797 = vpop.f32.mrf.mxu0
        %v1798 = vadd.f32 0.0, %v1797
        %v1799 = vpop.f32.mrf.mxu0
        %1800 = vmatprep.mubr.bf16.mxu0 0
        %1801 = vmatmul.mubr.bf16.gmra.mxu0 %v1668
        %v1802 = vpop.f32.mrf.mxu0
        %v1803 = vadd.f32 0.0, %v1802
        %v1804 = vpop.f32.mrf.mxu0
        %v1805 = vpop.f32.mrf.mxu0
        %v1806 = vadd.f32 0.0, %v1805
        %v1807 = vpop.f32.mrf.mxu0
        %1808 = vmatprep.mubr.bf16.mxu0 0
        %1809 = vmatmul.mubr.bf16.gmra.mxu0 %v1669
        %v1810 = vpop.f32.mrf.mxu0
        %v1811 = vadd.f32 0.0, %v1810
        %v1812 = vpop.f32.mrf.mxu0
        %v1813 = vpop.f32.mrf.mxu0
        %v1814 = vadd.f32 0.0, %v1813
        %v1815 = vpop.f32.mrf.mxu0
        %1816 = vmatprep.mubr.bf16.mxu0 0
        %1817 = vmatmul.mubr.bf16.gmra.mxu0 %v1670
        %v1818 = vpop.f32.mrf.mxu0
        %v1819 = vadd.f32 0.0, %v1818
        %v1820 = vpop.f32.mrf.mxu0
        %v1821 = vpop.f32.mrf.mxu0
        %v1822 = vadd.f32 0.0, %v1821
        %v1823 = vpop.f32.mrf.mxu0
        %1824 = vmatprep.mubr.bf16.mxu0 0
        %1825 = vmatmul.mubr.bf16.gmra.mxu0 %v1671
        %v1826 = vpop.f32.mrf.mxu0
        %v1827 = vadd.f32 0.0, %v1826
        %v1828 = vpop.f32.mrf.mxu0
        %v1829 = vpop.f32.mrf.mxu0
        %v1830 = vadd.f32 0.0, %v1829
        %v1831 = vpop.f32.mrf.mxu0
        %1832 = vdwg.mxu0
        %v1833 = vmul.f32 %v1771, %v1350
        %v1834 = vmul.f32 %v1774, %v1353
        %v1835 = vmul.f32 %v1779, %v1358
        %v1836 = vmul.f32 %v1782, %v1361
        %v1837 = vmul.f32 %v1787, %v1366
        %v1838 = vmul.f32 %v1790, %v1369
        %v1839 = vmul.f32 %v1795, %v1374
        %v1840 = vmul.f32 %v1798, %v1377
        %v1841 = vmul.f32 %v1803, %v1382
        %v1842 = vmul.f32 %v1806, %v1385
        %v1843 = vmul.f32 %v1811, %v1390
        %v1844 = vmul.f32 %v1814, %v1393
        %v1845 = vmul.f32 %v1819, %v1398
        %v1846 = vmul.f32 %v1822, %v1401
        %v1847 = vmul.f32 %v1827, %v1406
        %v1848 = vmul.f32 %v1830, %v1409
        %v1849 = vld [vmem:[%s610] sm:$0xf]
        %v1850 = vld [vmem:[%s610 + $0x4] sm:$0xf]
        %v1851 = vld [vmem:[%s610 + $0x8] sm:$0xf]
        %v1852 = vld [vmem:[%s610 + $0xc] sm:$0xf]
        %v1853 = vld [vmem:[%s610 + $0x10] sm:$0xf]
        %v1854 = vld [vmem:[%s610 + $0x14] sm:$0xf]
        %v1855 = vld [vmem:[%s610 + $0x18] sm:$0xf]
        %v1856 = vld [vmem:[%s610 + $0x1c] sm:$0xf]
        %v1857 = vld [vmem:[%s610 + $0x20] sm:$0xf]
        %v1858 = vld [vmem:[%s610 + $0x24] sm:$0xf]
        %v1859 = vld [vmem:[%s610 + $0x28] sm:$0xf]
        %v1860 = vld [vmem:[%s610 + $0x2c] sm:$0xf]
        %v1861 = vld [vmem:[%s610 + $0x30] sm:$0xf]
        %v1862 = vld [vmem:[%s610 + $0x34] sm:$0xf]
        %v1863 = vld [vmem:[%s610 + $0x38] sm:$0xf]
        %v1864 = vld [vmem:[%s610 + $0x3c] sm:$0xf]
        %v1865 = vld [vmem:[#allocation13] sm:$0xf]
        %v1866 = vld [vmem:[#allocation13 + $0x4] sm:$0xf]
        %v1867 = vld [vmem:[#allocation13 + $0x8] sm:$0xf]
        %v1868 = vld [vmem:[#allocation13 + $0xc] sm:$0xf]
        %v1869 = vld [vmem:[#allocation13 + $0x10] sm:$0xf]
        %v1870 = vld [vmem:[#allocation13 + $0x14] sm:$0xf]
        %v1871 = vld [vmem:[#allocation13 + $0x18] sm:$0xf]
        %v1872 = vld [vmem:[#allocation13 + $0x1c] sm:$0xf]
        %v1873 = vld [vmem:[#allocation13 + $0x20] sm:$0xf]
        %v1874 = vld [vmem:[#allocation13 + $0x24] sm:$0xf]
        %v1875 = vld [vmem:[#allocation13 + $0x28] sm:$0xf]
        %v1876 = vld [vmem:[#allocation13 + $0x2c] sm:$0xf]
        %v1877 = vld [vmem:[#allocation13 + $0x30] sm:$0xf]
        %v1878 = vld [vmem:[#allocation13 + $0x34] sm:$0xf]
        %v1879 = vld [vmem:[#allocation13 + $0x38] sm:$0xf]
        %v1880 = vld [vmem:[#allocation13 + $0x3c] sm:$0xf]
        %v1897 = vunpack.c.l.b16 %v1849
        %v1898 = vunpack.c.l.b16 %v1850
        %v1899 = vunpack.c.l.b16 %v1851
        %v1900 = vunpack.c.l.b16 %v1852
        %v1901 = vunpack.c.l.b16 %v1853
        %v1902 = vunpack.c.l.b16 %v1854
        %v1903 = vunpack.c.l.b16 %v1855
        %v1904 = vunpack.c.l.b16 %v1856
        %v1905 = vunpack.c.l.b16 %v1857
        %v1906 = vunpack.c.l.b16 %v1858
        %v1907 = vunpack.c.l.b16 %v1859
        %v1908 = vunpack.c.l.b16 %v1860
        %v1909 = vunpack.c.l.b16 %v1861
        %v1910 = vunpack.c.l.b16 %v1862
        %v1911 = vunpack.c.l.b16 %v1863
        %v1912 = vunpack.c.l.b16 %v1864
        %v1913 = vpack.c.b16 %v1898, %v1897
        %v1914 = vpack.c.b16 %v1900, %v1899
        %v1915 = vpack.c.b16 %v1902, %v1901
        %v1916 = vpack.c.b16 %v1904, %v1903
        %v1917 = vpack.c.b16 %v1906, %v1905
        %v1918 = vpack.c.b16 %v1908, %v1907
        %v1919 = vpack.c.b16 %v1910, %v1909
        %v1920 = vpack.c.b16 %v1912, %v1911
        %v1945 = vunpack.c.l.b16 %v1865
        %v1946 = vunpack.c.l.b16 %v1866
        %v1947 = vunpack.c.l.b16 %v1867
        %v1948 = vunpack.c.l.b16 %v1868
        %v1949 = vunpack.c.l.b16 %v1869
        %v1950 = vunpack.c.l.b16 %v1870
        %v1951 = vunpack.c.l.b16 %v1871
        %v1952 = vunpack.c.l.b16 %v1872
        %v1953 = vunpack.c.l.b16 %v1873
        %v1954 = vunpack.c.l.b16 %v1874
        %v1955 = vunpack.c.l.b16 %v1875
        %v1956 = vunpack.c.l.b16 %v1876
        %v1957 = vunpack.c.l.b16 %v1877
        %v1958 = vunpack.c.l.b16 %v1878
        %v1959 = vunpack.c.l.b16 %v1879
        %v1960 = vunpack.c.l.b16 %v1880
        %v1961 = vpack.c.b16 %v1946, %v1945
        %v1962 = vpack.c.b16 %v1948, %v1947
        %v1963 = vpack.c.b16 %v1950, %v1949
        %v1964 = vpack.c.b16 %v1952, %v1951
        %v1965 = vpack.c.b16 %v1954, %v1953
        %v1966 = vpack.c.b16 %v1956, %v1955
        %v1967 = vpack.c.b16 %v1958, %v1957
        %v1968 = vpack.c.b16 %v1960, %v1959
        %1977 = vmatprep.subr.bf16.mxu0 0
        %1978 = vmatpush1.bf16.msra.mxu0 %v1968
        %1979 = vmatprep.subr.bf16.mxu0 0
        %1980 = vmatpush1.bf16.msra.mxu0 %v1967
        %1981 = vmatprep.subr.bf16.mxu0 0
        %1982 = vmatpush1.bf16.msra.mxu0 %v1966
        %1983 = vmatprep.subr.bf16.mxu0 0
        %1984 = vmatpush1.bf16.msra.mxu0 %v1965
        %1985 = vmatprep.subr.bf16.mxu0 0
        %1986 = vmatpush1.bf16.msra.mxu0 %v1964
        %1987 = vmatprep.subr.bf16.mxu0 0
        %1988 = vmatpush1.bf16.msra.mxu0 %v1963
        %1989 = vmatprep.subr.bf16.mxu0 0
        %1990 = vmatpush1.bf16.msra.mxu0 %v1962
        %1991 = vmatprep.subr.bf16.mxu0 0
        %1992 = vmatpush1.bf16.msra.mxu0 %v1961
        %1993 = vmatprep.subr.bf16.mxu0 0
        %1994 = vmatpush2.bf16.msra.mxu0 0
        %1995 = vmatprep.subr.bf16.mxu0 0
        %1996 = vmatpush2.bf16.msra.mxu0 0
        %1997 = vmatprep.subr.bf16.mxu0 0
        %1998 = vmatpush2.bf16.msra.mxu0 0
        %1999 = vmatprep.subr.bf16.mxu0 0
        %2000 = vmatpush2.bf16.msra.mxu0 0
        %2001 = vmatprep.subr.bf16.mxu0 0
        %2002 = vmatpush2.bf16.msra.mxu0 0
        %2003 = vmatprep.subr.bf16.mxu0 0
        %2004 = vmatpush2.bf16.msra.mxu0 0
        %2005 = vmatprep.subr.bf16.mxu0 0
        %2006 = vmatpush2.bf16.msra.mxu0 0
        %2007 = vmatprep.subr.bf16.mxu0 0
        %2008 = vmatpush2.bf16.msra.mxu0 0
        %2009 = vmatprep.mubr.bf16.mxu0 0
        %2010 = vmatmul.mubr.bf16.gmra.mxu0 %v1913
        %v2011 = vpop.f32.mrf.mxu0
        %v2012 = vadd.f32 0.0, %v2011
        %v2013 = vpop.f32.mrf.mxu0
        %v2014 = vpop.f32.mrf.mxu0
        %v2015 = vadd.f32 0.0, %v2014
        %v2016 = vpop.f32.mrf.mxu0
        %2017 = vmatprep.mubr.bf16.mxu0 0
        %2018 = vmatmul.mubr.bf16.gmra.mxu0 %v1914
        %v2019 = vpop.f32.mrf.mxu0
        %v2020 = vadd.f32 0.0, %v2019
        %v2021 = vpop.f32.mrf.mxu0
        %v2022 = vpop.f32.mrf.mxu0
        %v2023 = vadd.f32 0.0, %v2022
        %v2024 = vpop.f32.mrf.mxu0
        %2025 = vmatprep.mubr.bf16.mxu0 0
        %2026 = vmatmul.mubr.bf16.gmra.mxu0 %v1915
        %v2027 = vpop.f32.mrf.mxu0
        %v2028 = vadd.f32 0.0, %v2027
        %v2029 = vpop.f32.mrf.mxu0
        %v2030 = vpop.f32.mrf.mxu0
        %v2031 = vadd.f32 0.0, %v2030
        %v2032 = vpop.f32.mrf.mxu0
        %2033 = vmatprep.mubr.bf16.mxu0 0
        %2034 = vmatmul.mubr.bf16.gmra.mxu0 %v1916
        %v2035 = vpop.f32.mrf.mxu0
        %v2036 = vadd.f32 0.0, %v2035
        %v2037 = vpop.f32.mrf.mxu0
        %v2038 = vpop.f32.mrf.mxu0
        %v2039 = vadd.f32 0.0, %v2038
        %v2040 = vpop.f32.mrf.mxu0
        %2041 = vmatprep.mubr.bf16.mxu0 0
        %2042 = vmatmul.mubr.bf16.gmra.mxu0 %v1917
        %v2043 = vpop.f32.mrf.mxu0
        %v2044 = vadd.f32 0.0, %v2043
        %v2045 = vpop.f32.mrf.mxu0
        %v2046 = vpop.f32.mrf.mxu0
        %v2047 = vadd.f32 0.0, %v2046
        %v2048 = vpop.f32.mrf.mxu0
        %2049 = vmatprep.mubr.bf16.mxu0 0
        %2050 = vmatmul.mubr.bf16.gmra.mxu0 %v1918
        %v2051 = vpop.f32.mrf.mxu0
        %v2052 = vadd.f32 0.0, %v2051
        %v2053 = vpop.f32.mrf.mxu0
        %v2054 = vpop.f32.mrf.mxu0
        %v2055 = vadd.f32 0.0, %v2054
        %v2056 = vpop.f32.mrf.mxu0
        %2057 = vmatprep.mubr.bf16.mxu0 0
        %2058 = vmatmul.mubr.bf16.gmra.mxu0 %v1919
        %v2059 = vpop.f32.mrf.mxu0
        %v2060 = vadd.f32 0.0, %v2059
        %v2061 = vpop.f32.mrf.mxu0
        %v2062 = vpop.f32.mrf.mxu0
        %v2063 = vadd.f32 0.0, %v2062
        %v2064 = vpop.f32.mrf.mxu0
        %2065 = vmatprep.mubr.bf16.mxu0 0
        %2066 = vmatmul.mubr.bf16.gmra.mxu0 %v1920
        %v2067 = vpop.f32.mrf.mxu0
        %v2068 = vadd.f32 0.0, %v2067
        %v2069 = vpop.f32.mrf.mxu0
        %v2070 = vpop.f32.mrf.mxu0
        %v2071 = vadd.f32 0.0, %v2070
        %v2072 = vpop.f32.mrf.mxu0
        %2073 = vdwg.mxu0
        %v2074 = vadd.f32 %v1833, %v2012
        %v2075 = vadd.f32 %v1834, %v2015
        %v2076 = vadd.f32 %v1835, %v2020
        %v2077 = vadd.f32 %v1836, %v2023
        %v2078 = vadd.f32 %v1837, %v2028
        %v2079 = vadd.f32 %v1838, %v2031
        %v2080 = vadd.f32 %v1839, %v2036
        %v2081 = vadd.f32 %v1840, %v2039
        %v2082 = vadd.f32 %v1841, %v2044
        %v2083 = vadd.f32 %v1842, %v2047
        %v2084 = vadd.f32 %v1843, %v2052
        %v2085 = vadd.f32 %v1844, %v2055
        %v2086 = vadd.f32 %v1845, %v2060
        %v2087 = vadd.f32 %v1846, %v2063
        %v2088 = vadd.f32 %v1847, %v2068
        %v2089 = vadd.f32 %v1848, %v2071
        %v2090 = vlaneseq
        %v2091 = vshrl.u32 %v2090, 7
        %v2092 = vadd.s32 %v2091, 8
        %v2093 = vld [vmem:[%s605] sm:$0x1]
        %v2094 = vlaneseq
        %v2095 = vshrl.u32 %v2094, 7
        %v2096 = vsub.s32 0, %v2095
        %v2097 = vrot.slane %v2093, %v2096
        %vm2098 = vcmp.eq.s32.totalorder %v2091, %v2097
        %vm2099 = vcmp.eq.s32.totalorder %v2092, %v2097
        %v2100 = vsel %vm2098, 1, 0
        %v2101 = vsel %vm2099, 1, 0
        %v2102 = vcvt.s32.f32 %v2100
        %v2103 = vcvt.s32.f32 %v2101
        %v2104 = vld [vmem:[#allocation17] sm:$0xff]
        %v2105 = vld [vmem:[#allocation17 + $0x8] sm:$0xff]
        %2106 = vmatprep.subr.mxu0 0.0
        %2107 = vmatpush1.msra.mxu0 %v2089
        %2108 = vmatprep.subr.mxu0 0.0
        %2109 = vmatpush1.msra.mxu0 %v2088
        %2110 = vmatprep.subr.mxu0 0.0
        %2111 = vmatpush1.msra.mxu0 %v2087
        %2112 = vmatprep.subr.mxu0 0.0
        %2113 = vmatpush1.msra.mxu0 %v2086
        %2114 = vmatprep.subr.mxu0 0.0
        %2115 = vmatpush1.msra.mxu0 %v2085
        %2116 = vmatprep.subr.mxu0 0.0
        %2117 = vmatpush1.msra.mxu0 %v2084
        %2118 = vmatprep.subr.mxu0 0.0
        %2119 = vmatpush1.msra.mxu0 %v2083
        %2120 = vmatprep.subr.mxu0 0.0
        %2121 = vmatpush1.msra.mxu0 %v2082
        %2122 = vmatprep.subr.mxu0 0.0
        %2123 = vmatpush1.msra.mxu0 %v2081
        %2124 = vmatprep.subr.mxu0 0.0
        %2125 = vmatpush1.msra.mxu0 %v2080
        %2126 = vmatprep.subr.mxu0 0.0
        %2127 = vmatpush1.msra.mxu0 %v2079
        %2128 = vmatprep.subr.mxu0 0.0
        %2129 = vmatpush1.msra.mxu0 %v2078
        %2130 = vmatprep.subr.mxu0 0.0
        %2131 = vmatpush1.msra.mxu0 %v2077
        %2132 = vmatprep.subr.mxu0 0.0
        %2133 = vmatpush1.msra.mxu0 %v2076
        %2134 = vmatprep.subr.mxu0 0.0
        %2135 = vmatpush1.msra.mxu0 %v2075
        %2136 = vmatprep.subr.mxu0 0.0
        %2137 = vmatpush1.msra.mxu0 %v2074
        %2138 = vmatprep.subr.mxu0 0.0
        %2139 = vmatpush2.msra.mxu0 0.0
        %2140 = vmatprep.subr.mxu0 0.0
        %2141 = vmatpush2.msra.mxu0 0.0
        %2142 = vmatprep.subr.mxu0 0.0
        %2143 = vmatpush2.msra.mxu0 0.0
        %2144 = vmatprep.subr.mxu0 0.0
        %2145 = vmatpush2.msra.mxu0 0.0
        %2146 = vmatprep.subr.mxu0 0.0
        %2147 = vmatpush2.msra.mxu0 0.0
        %2148 = vmatprep.subr.mxu0 0.0
        %2149 = vmatpush2.msra.mxu0 0.0
        %2150 = vmatprep.subr.mxu0 0.0
        %2151 = vmatpush2.msra.mxu0 0.0
        %2152 = vmatprep.subr.mxu0 0.0
        %2153 = vmatpush2.msra.mxu0 0.0
        %2154 = vmatprep.subr.mxu0 0.0
        %2155 = vmatpush2.msra.mxu0 0.0
        %2156 = vmatprep.subr.mxu0 0.0
        %2157 = vmatpush2.msra.mxu0 0.0
        %2158 = vmatprep.subr.mxu0 0.0
        %2159 = vmatpush2.msra.mxu0 0.0
        %2160 = vmatprep.subr.mxu0 0.0
        %2161 = vmatpush2.msra.mxu0 0.0
        %2162 = vmatprep.subr.mxu0 0.0
        %2163 = vmatpush2.msra.mxu0 0.0
        %2164 = vmatprep.subr.mxu0 0.0
        %2165 = vmatpush2.msra.mxu0 0.0
        %2166 = vmatprep.subr.mxu0 0.0
        %2167 = vmatpush2.msra.mxu0 0.0
        %2168 = vmatprep.subr.mxu0 0.0
        %2169 = vmatpush2.msra.mxu0 0.0
        %2170 = vmatprep.mubr.f32.mxu0 0.0
        %2171 = vmatmul.mubr.f32.gmra.mxu0 %v2102
        %v2172 = vpop.f32.mrf.mxu0
        %v2173 = vadd.f32 0.0, %v2172
        %v2174 = vpop.f32.mrf.mxu0
        %2175 = vmatprep.mubr.f32.mxu0 0.0
        %2176 = vmatmul.mubr.f32.gmra.mxu0 %v2103
        %v2177 = vpop.f32.mrf.mxu0
        %v2178 = vadd.f32 0.0, %v2177
        %v2179 = vpop.f32.mrf.mxu0
        %2180 = vdwg.mxu0
        %v2181 = vadd.f32 %v2104, %v2173
        %v2182 = vadd.f32 %v2105, %v2178
        %2183 = vst [vmem:[#allocation17] sm:$0xff] %v2181
        %2184 = vst [vmem:[#allocation17 + $0x8] sm:$0xff] %v2182
        %p2185 = scmp.eq.s32.totalorder %s30, 1
        // Predicated region
        $region113: #{tpu_custom_call.1} parent=71 // pred_check
          %p2186 = pneg %p2185
        $region114: #{tpu_custom_call.1} parent=71 // pred_check_branch
          %2188 = sbr.rel (%p2186) target = $region116
        $region115: #{tpu_custom_call.1} parent=71 // pred_region
          %v2189 = vld [vmem:[#allocation2] sm:$0xf]
          %v2190 = vld [vmem:[#allocation2 + $0x4] sm:$0xf]
          %v2191 = vld [vmem:[#allocation14] sm:$0xf]
          %v2192 = vld [vmem:[#allocation14 + $0x4] sm:$0xf]
          %v2193 = vld [vmem:[#allocation14 + $0x8] sm:$0xf]
          %v2194 = vld [vmem:[#allocation14 + $0xc] sm:$0xf]
          %v2195 = vld [vmem:[#allocation14 + $0x10] sm:$0xf]
          %v2196 = vld [vmem:[#allocation14 + $0x14] sm:$0xf]
          %v2197 = vld [vmem:[#allocation14 + $0x18] sm:$0xf]
          %v2198 = vld [vmem:[#allocation14 + $0x1c] sm:$0xf]
          %v2199 = vld [vmem:[#allocation14 + $0x20] sm:$0xf]
          %v2200 = vld [vmem:[#allocation14 + $0x24] sm:$0xf]
          %v2201 = vld [vmem:[#allocation14 + $0x28] sm:$0xf]
          %v2202 = vld [vmem:[#allocation14 + $0x2c] sm:$0xf]
          %v2203 = vld [vmem:[#allocation14 + $0x30] sm:$0xf]
          %v2204 = vld [vmem:[#allocation14 + $0x34] sm:$0xf]
          %v2205 = vld [vmem:[#allocation14 + $0x38] sm:$0xf]
          %v2206 = vld [vmem:[#allocation14 + $0x3c] sm:$0xf]
          %v2207 = vld [vmem:[#allocation5] sm:$0xf]
          %v2208 = vld [vmem:[#allocation5 + $0x4] sm:$0xf]
          %v2209 = vld [vmem:[#allocation16] sm:$0xf]
          %v2210 = vld [vmem:[#allocation16 + $0x4] sm:$0xf]
          %v2211 = vld [vmem:[#allocation16 + $0x8] sm:$0xf]
          %v2212 = vld [vmem:[#allocation16 + $0xc] sm:$0xf]
          %v2213 = vld [vmem:[#allocation16 + $0x10] sm:$0xf]
          %v2214 = vld [vmem:[#allocation16 + $0x14] sm:$0xf]
          %v2215 = vld [vmem:[#allocation16 + $0x18] sm:$0xf]
          %v2216 = vld [vmem:[#allocation16 + $0x1c] sm:$0xf]
          %v2217 = vld [vmem:[#allocation16 + $0x20] sm:$0xf]
          %v2218 = vld [vmem:[#allocation16 + $0x24] sm:$0xf]
          %v2219 = vld [vmem:[#allocation16 + $0x28] sm:$0xf]
          %v2220 = vld [vmem:[#allocation16 + $0x2c] sm:$0xf]
          %v2221 = vld [vmem:[#allocation16 + $0x30] sm:$0xf]
          %v2222 = vld [vmem:[#allocation16 + $0x34] sm:$0xf]
          %v2223 = vld [vmem:[#allocation16 + $0x38] sm:$0xf]
          %v2224 = vld [vmem:[#allocation16 + $0x3c] sm:$0xf]
          %v2227 = vunpack.c.l.b16 %v2207
          %v2228 = vunpack.c.l.b16 %v2208
          %v2229 = vpack.c.b16 %v2228, %v2227
          %v2247 = vunpack.c.l.b16 %v2209
          %v2248 = vunpack.c.l.b16 %v2210
          %v2249 = vunpack.c.l.b16 %v2211
          %v2250 = vunpack.c.l.b16 %v2212
          %v2251 = vunpack.c.l.b16 %v2213
          %v2252 = vunpack.c.l.b16 %v2214
          %v2253 = vunpack.c.l.b16 %v2215
          %v2254 = vunpack.c.l.b16 %v2216
          %v2255 = vunpack.c.l.b16 %v2217
          %v2256 = vunpack.c.l.b16 %v2218
          %v2257 = vunpack.c.l.b16 %v2219
          %v2258 = vunpack.c.l.b16 %v2220
          %v2259 = vunpack.c.l.b16 %v2221
          %v2260 = vunpack.c.l.b16 %v2222
          %v2261 = vunpack.c.l.b16 %v2223
          %v2262 = vunpack.c.l.b16 %v2224
          %v2263 = vpack.c.b16 %v2248, %v2247
          %v2264 = vpack.c.b16 %v2250, %v2249
          %v2265 = vpack.c.b16 %v2252, %v2251
          %v2266 = vpack.c.b16 %v2254, %v2253
          %v2267 = vpack.c.b16 %v2256, %v2255
          %v2268 = vpack.c.b16 %v2258, %v2257
          %v2269 = vpack.c.b16 %v2260, %v2259
          %v2270 = vpack.c.b16 %v2262, %v2261
          %2279 = vmatprep.subr.bf16.mxu0 0
          %2280 = vmatpush1.bf16.msra.mxu0 %v2270
          %2281 = vmatprep.subr.bf16.mxu0 0
          %2282 = vmatpush1.bf16.msra.mxu0 %v2269
          %2283 = vmatprep.subr.bf16.mxu0 0
          %2284 = vmatpush1.bf16.msra.mxu0 %v2268
          %2285 = vmatprep.subr.bf16.mxu0 0
          %2286 = vmatpush1.bf16.msra.mxu0 %v2267
          %2287 = vmatprep.subr.bf16.mxu0 0
          %2288 = vmatpush1.bf16.msra.mxu0 %v2266
          %2289 = vmatprep.subr.bf16.mxu0 0
          %2290 = vmatpush1.bf16.msra.mxu0 %v2265
          %2291 = vmatprep.subr.bf16.mxu0 0
          %2292 = vmatpush1.bf16.msra.mxu0 %v2264
          %2293 = vmatprep.subr.bf16.mxu0 0
          %2294 = vmatpush1.bf16.msra.mxu0 %v2263
          %2295 = vmatprep.subr.bf16.mxu0 0
          %2296 = vmatpush2.bf16.msra.mxu0 0
          %2297 = vmatprep.subr.bf16.mxu0 0
          %2298 = vmatpush2.bf16.msra.mxu0 0
          %2299 = vmatprep.subr.bf16.mxu0 0
          %2300 = vmatpush2.bf16.msra.mxu0 0
          %2301 = vmatprep.subr.bf16.mxu0 0
          %2302 = vmatpush2.bf16.msra.mxu0 0
          %2303 = vmatprep.subr.bf16.mxu0 0
          %2304 = vmatpush2.bf16.msra.mxu0 0
          %2305 = vmatprep.subr.bf16.mxu0 0
          %2306 = vmatpush2.bf16.msra.mxu0 0
          %2307 = vmatprep.subr.bf16.mxu0 0
          %2308 = vmatpush2.bf16.msra.mxu0 0
          %2309 = vmatprep.subr.bf16.mxu0 0
          %2310 = vmatpush2.bf16.msra.mxu0 0
          %2311 = vmatprep.mubr.bf16.mxu0 0
          %2312 = vmatmul.mubr.bf16.gmra.mxu0 %v2229
          %v2313 = vpop.f32.mrf.mxu0
          %v2314 = vadd.f32 0.0, %v2313
          %v2315 = vpop.f32.mrf.mxu0
          %v2316 = vpop.f32.mrf.mxu0
          %v2317 = vadd.f32 0.0, %v2316
          %v2318 = vpop.f32.mrf.mxu0
          %2319 = vdwg.mxu0
          %v2322 = vunpack.c.l.b16 %v2189
          %v2323 = vunpack.c.l.b16 %v2190
          %v2324 = vpack.c.b16 %v2323, %v2322
          %v2342 = vunpack.c.l.b16 %v2191
          %v2343 = vunpack.c.l.b16 %v2192
          %v2344 = vunpack.c.l.b16 %v2193
          %v2345 = vunpack.c.l.b16 %v2194
          %v2346 = vunpack.c.l.b16 %v2195
          %v2347 = vunpack.c.l.b16 %v2196
          %v2348 = vunpack.c.l.b16 %v2197
          %v2349 = vunpack.c.l.b16 %v2198
          %v2350 = vunpack.c.l.b16 %v2199
          %v2351 = vunpack.c.l.b16 %v2200
          %v2352 = vunpack.c.l.b16 %v2201
          %v2353 = vunpack.c.l.b16 %v2202
          %v2354 = vunpack.c.l.b16 %v2203
          %v2355 = vunpack.c.l.b16 %v2204
          %v2356 = vunpack.c.l.b16 %v2205
          %v2357 = vunpack.c.l.b16 %v2206
          %v2358 = vpack.c.b16 %v2343, %v2342
          %v2359 = vpack.c.b16 %v2345, %v2344
          %v2360 = vpack.c.b16 %v2347, %v2346
          %v2361 = vpack.c.b16 %v2349, %v2348
          %v2362 = vpack.c.b16 %v2351, %v2350
          %v2363 = vpack.c.b16 %v2353, %v2352
          %v2364 = vpack.c.b16 %v2355, %v2354
          %v2365 = vpack.c.b16 %v2357, %v2356
          %2374 = vmatprep.subr.bf16.mxu0 0
          %2375 = vmatpush1.bf16.msra.mxu0 %v2365
          %2376 = vmatprep.subr.bf16.mxu0 0
          %2377 = vmatpush1.bf16.msra.mxu0 %v2364
          %2378 = vmatprep.subr.bf16.mxu0 0
          %2379 = vmatpush1.bf16.msra.mxu0 %v2363
          %2380 = vmatprep.subr.bf16.mxu0 0
          %2381 = vmatpush1.bf16.msra.mxu0 %v2362
          %2382 = vmatprep.subr.bf16.mxu0 0
          %2383 = vmatpush1.bf16.msra.mxu0 %v2361
          %2384 = vmatprep.subr.bf16.mxu0 0
          %2385 = vmatpush1.bf16.msra.mxu0 %v2360
          %2386 = vmatprep.subr.bf16.mxu0 0
          %2387 = vmatpush1.bf16.msra.mxu0 %v2359
          %2388 = vmatprep.subr.bf16.mxu0 0
          %2389 = vmatpush1.bf16.msra.mxu0 %v2358
          %2390 = vmatprep.subr.bf16.mxu0 0
          %2391 = vmatpush2.bf16.msra.mxu0 0
          %2392 = vmatprep.subr.bf16.mxu0 0
          %2393 = vmatpush2.bf16.msra.mxu0 0
          %2394 = vmatprep.subr.bf16.mxu0 0
          %2395 = vmatpush2.bf16.msra.mxu0 0
          %2396 = vmatprep.subr.bf16.mxu0 0
          %2397 = vmatpush2.bf16.msra.mxu0 0
          %2398 = vmatprep.subr.bf16.mxu0 0
          %2399 = vmatpush2.bf16.msra.mxu0 0
          %2400 = vmatprep.subr.bf16.mxu0 0
          %2401 = vmatpush2.bf16.msra.mxu0 0
          %2402 = vmatprep.subr.bf16.mxu0 0
          %2403 = vmatpush2.bf16.msra.mxu0 0
          %2404 = vmatprep.subr.bf16.mxu0 0
          %2405 = vmatpush2.bf16.msra.mxu0 0
          %2406 = vmatprep.mubr.bf16.mxu0 0
          %2407 = vmatmul.mubr.bf16.gmra.mxu0 %v2324
          %v2408 = vpop.f32.mrf.mxu0
          %v2409 = vadd.f32 %v2314, %v2408
          %v2410 = vpop.f32.mrf.mxu0
          %v2411 = vpop.f32.mrf.mxu0
          %v2412 = vadd.f32 %v2317, %v2411
          %v2413 = vpop.f32.mrf.mxu0
          %2414 = vdwg.mxu0
          %v2415 = vld [vmem:[#allocation17] sm:$0xff]
          %v2416 = vld [vmem:[#allocation17 + $0x8] sm:$0xff]
          %v2417 = vadd.f32 %v2409, %v2415
          %v2418 = vadd.f32 %v2412, %v2416
          %v2419 = vxor.u32 %v2417, 2147483648
          %v2420 = vxor.u32 %v2418, 2147483648
          %v2421 = vmul.f32 %v2419, 1.442695
          %v2422 = vpow.pop %v2421
          %v2423 = vmul.f32 %v2420, 1.442695
          %v2424 = vpow.pop %v2423
          %v2425 = vadd.f32 %v2422, 1.0
          %v2426 = vadd.f32 %v2424, 1.0
          %v2427 = vrcp.pop %v2425
          %v2428 = vmul.f32 1.0, %v2427
          %v2429 = vrcp.pop %v2426
          %v2430 = vmul.f32 1.0, %v2429
          %v2431 = vmul.f32 %v2417, %v2428
          %v2432 = vmul.f32 %v2418, %v2430
          %2433 = vst [vmem:[#allocation17] sm:$0xff] %v2431
          %2434 = vst [vmem:[#allocation17 + $0x8] sm:$0xff] %v2432
        $region116: #{tpu_custom_call.1} parent=71 // pred_fallthru
          _
        // Predicated region
        $region117: #{tpu_custom_call.1} parent=71 // pred_check
          %p2435 = pneg %p336
        $region118: #{tpu_custom_call.1} parent=71 // pred_check_branch
          %2437 = sbr.rel (%p2435) target = $region120
        $region119: #{tpu_custom_call.1} parent=71 // pred_region
          %s2439 = ssub.s32 256, 256
          %2440 = vsyncadd [#allocation4], %s2439
          %s2441 = sshll.u32 [#allocation17], 4
          %s2442 = int_to_ptr.vmem [resolvable:$true] %s2441
          %2447 = dma.vmem_to_hbm [thread:$0]  %s2442, 256, %s13, [#allocation4], 128, 128, 8
        $region120: #{tpu_custom_call.1} parent=71 // pred_fallthru
          _
        // Predicated region
        $region121: #{tpu_custom_call.1} parent=71 // pred_check
          %p2448 = pneg %p336
        $region122: #{tpu_custom_call.1} parent=71 // pred_check_branch
          %2450 = sbr.rel (%p2448) target = $region124
        $region123: #{tpu_custom_call.1} parent=71 // pred_region
          %2451 = dma.done [#allocation4], 256
        $region124: #{tpu_custom_call.1} parent=71 // pred_fallthru
          _
      $region72: #{tpu_custom_call.1} parent=5 // pred_fallthru
        _
      %p2452 = scmp.le.s32.totalorder 2, %s25
      // Predicated region
      $region125: #{tpu_custom_call.1} parent=5 // pred_check
        %p2453 = pneg %p2452
      $region126: #{tpu_custom_call.1} parent=5 // pred_check_branch
        %2455 = sbr.rel (%p2453) target = $region128
      $region127: #{tpu_custom_call.1} parent=5 // pred_region
        %s2456 = ssub.s32 %s25, 2
      $region128: #{tpu_custom_call.1} parent=5 // pred_fallthru
        _
    $region6: #{tpu_custom_call.1} parent=1 // loop_footer
      %s29 = sadd.s32 1, %s25
    $region7: #{tpu_custom_call.1} parent=1 // loop_footer_branch
      %24 = sbr.rel target = $region3
    $region8: #{tpu_custom_call.1} parent=1 // loop_exit
      _
    %2457 = vsyncpa [#allocation3], 1
    %s2458 = scalar_lea.sflag [#allocation3], 1
    %2459 = vsyncpa %s2458, 1
    %2460 = vsyncpa [#allocation6], 1
    %2461 = vsyncpa [#allocation9], 1
    %2462 = vsyncpa [#allocation12], 1
    %2463 = vsyncpa [#allocation15], 1
    %2464 = vsyncpa [#allocation4], 1
    %s2465 = scalar_lea.sflag [#allocation4], 1
    %2466 = vsyncpa %s2465, 1

</llo_original>
